<compile_context>
chip_gen: v5e
topology: v5e:2x2
jax: 0.10.0
libtpu: 0.0.40
codegen_flags: <defaults>
</compile_context>

<pallas_src>
import functools

import jax
import jax.numpy as jnp
from jax.experimental import pallas as pl
from jax.experimental.pallas import tpu as pltpu

_LANES = 128      # vreg lane width
_SUBLANES = 8     # vreg sublane count (f32)
_T_CHUNK = 32     # default timesteps per grid step (tuning knob)


def _round_up(x: int, m: int) -> int:
    return ((x + m - 1) // m) * m


def _pad_gate_cols(w, h, h_pad):
    """Pad each of the 3 gate blocks [r|z|n] along the last dim from h to h_pad."""
    if h_pad == h:
        return w
    pads = [(0, 0)] * (w.ndim - 1) + [(0, h_pad - h)]
    return jnp.concatenate(
        [jnp.pad(w[..., g * h:(g + 1) * h], pads) for g in range(3)], axis=-1)


def _tpu_device_kind() -> str:
    try:
        d = jax.devices()[0]
        if d.platform == "tpu":
            return str(getattr(d, "device_kind", "")).lower()
    except Exception:
        pass
    return ""


def _gru_rec_kernel(gi_ref, whh_ref, bhhn_ref, h0_ref, out_ref, h_scr,
                    *, hidden_p, t_chunk):
    """Sequential GRU recurrence over one chunk of timesteps.

    grid = (batch_blocks ["parallel"], n_time_chunks ["arbitrary"])

    gi_ref   : (T, Bblk, 3Hp) f32  precomputed x @ W_ih^T + b_ih + [b_hr|b_hz|0]
    whh_ref  : (Hp, 3Hp)      f32  W_hh^T, VMEM-resident (single buffered)
    bhhn_ref : (1, Hp)        f32  b_hh for the n gate, VMEM-resident
    h0_ref   : (Bblk, Hp)     f32  initial hidden state for this batch block
    out_ref  : (T, Bblk, Hp)  f32  per-timestep hidden states (time-major)
    h_scr    : (Bblk, Hp)     f32  recurrent state, persists across time chunks
    """
    hp = hidden_p
    b_blk = h0_ref.shape[0]
    s = pl.program_id(1)

    @pl.when(s == 0)
    def _():
        h_scr[...] = h0_ref[...]

    # VMEM-resident weights, loaded once per chunk; gate-split for MXU/EUP overlap.
    whh_rz = whh_ref[:, 0:2 * hp]          # (Hp, 2Hp)
    whh_n = whh_ref[:, 2 * hp:3 * hp]      # (Hp, Hp)
    # Hoist the n-gate bias broadcast out of the unrolled loop.
    bhh_n = jnp.broadcast_to(bhhn_ref[...], (b_blk, hp))

    def step(j, h):
        gi = gi_ref[j]                     # (Bblk, 3Hp) f32
        gh_rz = jnp.dot(h, whh_rz, preferred_element_type=jnp.float32)
        r = jax.nn.sigmoid(gi[:, 0:hp] + gh_rz[:, 0:hp])
        z = jax.nn.sigmoid(gi[:, hp:2 * hp] + gh_rz[:, hp:2 * hp])
        gh_n = jnp.dot(h, whh_n, preferred_element_type=jnp.float32)
        n = jnp.tanh(gi[:, 2 * hp:3 * hp] + r * (gh_n + bhh_n))
        h_new = n + z * (h - n)            # == (1-z)*n + z*h, one fewer VPU op
        out_ref[j] = h_new.astype(out_ref.dtype)
        return h_new

    h_scr[...] = jax.lax.fori_loop(0, t_chunk, step, h_scr[...], unroll=True)


def _gru_recurrence(gi_tm, whh_t, bhh_n, h0, *, hidden_p, t_chunk,
                    batch_blocks, vmem_limit_bytes):
    """gi_tm: (S_pad, Bp, 3Hp) f32.  Returns out_tm: (S_pad, Bp, Hp) f32."""
    s_pad, bp, g3 = gi_tm.shape
    hp = hidden_p
    b_blk = bp // batch_blocks
    n_chunks = s_pad // t_chunk

    kernel = functools.partial(_gru_rec_kernel, hidden_p=hp, t_chunk=t_chunk)

    return pl.pallas_call(
        kernel,
        out_shape=jax.ShapeDtypeStruct((s_pad, bp, hp), jnp.float32),
        grid_spec=pltpu.PrefetchScalarGridSpec(
            num_scalar_prefetch=0,
            grid=(batch_blocks, n_chunks),
            in_specs=[
                pl.BlockSpec((t_chunk, b_blk, g3), lambda c, s: (s, c, 0)),
                pl.BlockSpec(memory_space=pltpu.MemorySpace.VMEM),   # W_hh^T
                pl.BlockSpec(memory_space=pltpu.MemorySpace.VMEM),   # b_hh (n gate)
                pl.BlockSpec((b_blk, hp), lambda c, s: (c, 0)),      # h0 block
            ],
            out_specs=pl.BlockSpec((t_chunk, b_blk, hp),
                                   lambda c, s: (s, c, 0)),
            scratch_shapes=[pltpu.VMEM((b_blk, hp), jnp.float32)],
        ),
        compiler_params=pltpu.CompilerParams(
            dimension_semantics=("parallel", "arbitrary"),
            vmem_limit_bytes=vmem_limit_bytes),
    )(gi_tm, whh_t, bhh_n, h0)


class RNNCellGRUPallas:
    """Mirrors RNNCell(n_input, n_layers, n_hidden, rnn_cell='GRU',
    dropout_rate=0.0, bidirectional=False).forward(x, hidden=None)."""

    def __init__(self, n_input, n_layers, n_hidden, key, t_chunk=_T_CHUNK):
        self.n_input = n_input
        self.n_layers = n_layers
        self.n_hidden = n_hidden
        self.n_hidden_p = _round_up(n_hidden, _LANES)
        self.t_chunk = t_chunk
        H, Hp = n_hidden, self.n_hidden_p

        # Deterministic init: same shapes & uniform(-1/sqrt(H), 1/sqrt(H))
        # scheme as torch.nn.GRU, gate order [r, z, n].
        bound = 1.0 / float(n_hidden) ** 0.5
        self.raw_params = []   # torch-layout f32 (used by the pure-JAX reference)
        self.params = []       # transposed / gate-padded (used by the kernel)
        for layer in range(n_layers):
            in_sz = n_input if layer == 0 else n_hidden
            key, k1, k2, k3, k4 = jax.random.split(key, 5)
            w_ih = jax.random.uniform(k1, (3 * H, in_sz), jnp.float32, -bound, bound)
            w_hh = jax.random.uniform(k2, (3 * H, H), jnp.float32, -bound, bound)
            b_ih = jax.random.uniform(k3, (3 * H,), jnp.float32, -bound, bound)
            b_hh = jax.random.uniform(k4, (3 * H,), jnp.float32, -bound, bound)
            self.raw_params.append((w_ih, w_hh, b_ih, b_hh))

            wih_t = _pad_gate_cols(w_ih.T, H, Hp)                # (in, 3Hp)
            if layer > 0:   # inputs of deeper layers are Hp-wide (zero padded)
                wih_t = jnp.pad(wih_t, ((0, Hp - H), (0, 0)))    # (Hp, 3Hp)
            whh_t = jnp.pad(w_hh.T, ((0, Hp - H), (0, 0)))       # (Hp, 3H)
            whh_t = _pad_gate_cols(whh_t, H, Hp)                 # (Hp, 3Hp)

            bih_p = _pad_gate_cols(b_ih, H, Hp)                  # (3Hp,)
            bhh_p = _pad_gate_cols(b_hh, H, Hp)                  # (3Hp,)
            # Fold the r/z recurrent biases into the precomputed gi; keep the
            # n-gate recurrent bias separate (it must stay inside r ⊙ (...)).
            bih_folded = bih_p.at[:2 * Hp].add(bhh_p[:2 * Hp])   # (3Hp,)
            bhh_n = bhh_p[2 * Hp:].reshape(1, Hp)                # (1, Hp)

            self.params.append((wih_t, whh_t, bih_folded, bhh_n))

    def __call__(self, x, hidden=None):
        """x: (batch, seq, n_input).  Returns (output, h_n) like torch GRU:
        output: (batch, seq, n_hidden), h_n: (n_layers, batch, n_hidden)."""
        B, S, _ = x.shape
        H, Hp = self.n_hidden, self.n_hidden_p
        Bp = _round_up(B, _SUBLANES)
        t_chunk = min(self.t_chunk, S)
        S_pad = _round_up(S, t_chunk)

        # Split the batch across TensorCores only on chips that actually have
        # two TCs (v7x); on v5e/v6e a "parallel" axis just serializes the
        # recurrence twice.
        kind = _tpu_device_kind()
        is_v7x = "v7" in kind
        batch_blocks = 2 if (is_v7x and Bp % (2 * _SUBLANES) == 0) else 1
        vmem_limit = (48 if is_v7x else 96) * 1024 * 1024

        if hidden is None:
            h0_all = jnp.zeros((self.n_layers, Bp, Hp), jnp.float32)
        else:
            h0_all = jnp.pad(hidden.astype(jnp.float32),
                             ((0, 0), (0, Bp - B), (0, Hp - H)))

        x_b = jnp.pad(x.astype(jnp.float32), ((0, Bp - B), (0, 0), (0, 0)))

        out_tm = None
        h_finals = []
        for layer, (wih_t, whh_t, bih, bhh_n) in enumerate(self.params):
            # Hoisted input projection for ALL timesteps (single big matmul),
            # written straight into time-major layout.  All-f32 (MXU-friendly,
            # and supported in interpret mode unlike bf16xbf16->f32).
            if layer == 0:
                gi = jnp.einsum('bsi,ik->sbk', x_b, wih_t,
                                preferred_element_type=jnp.float32) + bih
                if S_pad != S:   # pad time with zeros; outputs there are discarded
                    gi = jnp.pad(gi, ((0, S_pad - S), (0, 0), (0, 0)))
            else:
                gi = jnp.einsum('sbh,hk->sbk', out_tm, wih_t,
                                preferred_element_type=jnp.float32) + bih

            out_tm = _gru_recurrence(gi, whh_t, bhh_n, h0_all[layer],
                                     hidden_p=Hp, t_chunk=t_chunk,
                                     batch_blocks=batch_blocks,
                                     vmem_limit_bytes=vmem_limit)
            h_finals.append(out_tm[S - 1, :B, :H])   # h_n == output at t = S-1

        output = jnp.transpose(out_tm[:S, :B, :H], (1, 0, 2))   # (B, S, H)
        return output, jnp.stack(h_finals, axis=0)


def _gru_reference(x, raw_params, h0_all):
    """Pure-JAX f32 lax.scan reference (torch.nn.GRU semantics)."""
    x_tm = jnp.transpose(x, (1, 0, 2)).astype(jnp.float32)
    h_finals = []
    for layer, (w_ih, w_hh, b_ih, b_hh) in enumerate(raw_params):
        H = w_hh.shape[1]
        wih_t = w_ih.T
        whh_t = w_hh.T

        def step(h, x_t, wih_t=wih_t, whh_t=whh_t, b_ih=b_ih, b_hh=b_hh, H=H):
            gi = jnp.dot(x_t, wih_t, preferred_element_type=jnp.float32) + b_ih
            gh = jnp.dot(h, whh_t, preferred_element_type=jnp.float32) + b_hh
            r = jax.nn.sigmoid(gi[:, :H] + gh[:, :H])
            z = jax.nn.sigmoid(gi[:, H:2 * H] + gh[:, H:2 * H])
            n = jnp.tanh(gi[:, 2 * H:] + r * gh[:, 2 * H:])
            h_new = (1.0 - z) * n + z * h
            return h_new, h_new

        h_n, out_tm = jax.lax.scan(step, h0_all[layer], x_tm)
        x_tm = out_tm
        h_finals.append(h_n)
    return jnp.transpose(x_tm, (1, 0, 2)), jnp.stack(h_finals, 0)


if __name__ == "__main__":
    key = jax.random.PRNGKey(0)
    k_param, k_x = jax.random.split(key)

    batch, seq, n_input, n_hidden, n_layers = 2, 8, 4, 32, 2
    model = RNNCellGRUPallas(n_input, n_layers, n_hidden, k_param)

    x = jax.random.normal(k_x, (batch, seq, n_input), jnp.float32)

    output, h_n = model(x)          # hidden=None -> zeros, like PyTorch
    output = jax.block_until_ready(output)
    h_n = jax.block_until_ready(h_n)

    assert output.shape == (batch, seq, n_hidden)
    assert h_n.shape == (n_layers, batch, n_hidden)

    ref_out, ref_hn = _gru_reference(
        x, model.raw_params,
        jnp.zeros((n_layers, batch, n_hidden), jnp.float32))
    max_out = float(jnp.max(jnp.abs(output - ref_out)))
    max_hn = float(jnp.max(jnp.abs(h_n - ref_hn)))
    assert jnp.allclose(output, ref_out, atol=2e-3, rtol=2e-3), max_out
    assert jnp.allclose(h_n, ref_hn, atol=2e-3, rtol=2e-3), max_hn

    print("KERNEL_OK")
</pallas_src>

<mosaic_0001>
module attributes {stable_mosaic.version = 11 : i64} {
  func.func @_gru_rec_kernel(%arg0: i32, %arg1: i32, %arg2: memref<8x8x384xf32, #tpu.memory_space<vmem>>, %arg3: memref<128x384xf32, #tpu.memory_space<vmem>>, %arg4: memref<1x128xf32, #tpu.memory_space<vmem>>, %arg5: memref<8x128xf32, #tpu.memory_space<vmem>>, %arg6: memref<8x8x128xf32, #tpu.memory_space<vmem>>, %arg7: memref<8x128xf32, #tpu.memory_space<vmem>>) attributes {dimension_semantics = [#tpu.dimension_semantics<parallel>, #tpu.dimension_semantics<arbitrary>], iteration_bounds = array<i64: 1, 1>, scalar_prefetch = 0 : i64, scratch_operands = 1 : i64, tpu.core_type = #tpu.core_type<tc>, window_params = [{transform_indices = @transform_0, window_bounds = array<i64: 8, 8, 384>}, {pipeline_mode = #tpu.pipeline_mode<synchronous>, transform_indices = @transform_1, window_bounds = array<i64: 128, 384>}, {pipeline_mode = #tpu.pipeline_mode<synchronous>, transform_indices = @transform_2, window_bounds = array<i64: 1, 128>}, {transform_indices = @transform_3, window_bounds = array<i64: 8, 128>}, {transform_indices = @transform_4, window_bounds = array<i64: 8, 8, 128>}]} {
    %c0_i32 = arith.constant 0 : i32
    %0 = arith.cmpi eq, %arg1, %c0_i32 : i32
    %1 = arith.extui %0 : i1 to i32
    %c0_i32_0 = arith.constant 0 : i32
    %2 = arith.cmpi ne, %1, %c0_i32_0 : i32
    scf.if %2 {
      %c0_73 = arith.constant 0 : index
      %c0_74 = arith.constant 0 : index
      %274 = vector.load %arg5[%c0_73, %c0_74] : memref<8x128xf32, #tpu.memory_space<vmem>>, vector<8x128xf32>
      %c0_75 = arith.constant 0 : index
      %c0_76 = arith.constant 0 : index
      %275 = vector.load %arg7[%c0_75, %c0_76] : memref<8x128xf32, #tpu.memory_space<vmem>>, vector<8x128xf32>
      tpu.vector_store %arg7[%c0_75, %c0_76], %274 {strides = array<i32>} : memref<8x128xf32, #tpu.memory_space<vmem>>, vector<8x128xf32>,
    } else {
    }
    %c0 = arith.constant 0 : index
    %c0_1 = arith.constant 0 : index
    %3 = vector.load %arg3[%c0, %c0_1] : memref<128x384xf32, #tpu.memory_space<vmem>>, vector<128x256xf32>
    %c0_2 = arith.constant 0 : index
    %c256 = arith.constant 256 : index
    %4 = vector.load %arg3[%c0_2, %c256] : memref<128x384xf32, #tpu.memory_space<vmem>>, vector<128x128xf32>
    %c0_3 = arith.constant 0 : index
    %c0_4 = arith.constant 0 : index
    %5 = vector.load %arg4[%c0_3, %c0_4] : memref<1x128xf32, #tpu.memory_space<vmem>>, vector<1x128xf32>
    %6 = vector.shape_cast %5 : vector<1x128xf32> to vector<1x128xf32>
    %7 = vector.broadcast %6 : vector<1x128xf32> to vector<8x128xf32>
    %c0_5 = arith.constant 0 : index
    %c0_6 = arith.constant 0 : index
    %8 = vector.load %arg7[%c0_5, %c0_6] : memref<8x128xf32, #tpu.memory_space<vmem>>, vector<8x128xf32>
    %c0_i32_7 = arith.constant 0 : i32
    %9 = arith.index_cast %c0_i32_7 : i32 to index
    %c0_8 = arith.constant 0 : index
    %c0_9 = arith.constant 0 : index
    %10 = vector.load %arg2[%9, %c0_8, %c0_9] : memref<8x8x384xf32, #tpu.memory_space<vmem>>, vector<1x8x384xf32>
    %11 = vector.shape_cast %10 : vector<1x8x384xf32> to vector<8x384xf32>
    %cst = arith.constant dense<0.000000e+00> : vector<8x256xf32>
    %12 = tpu.matmul %8, %3, %cst {dimension_numbers = #tpu.dot_dimension_numbers<[1], [0], [0], [1], [0, 0, 1, 1], [], []>} : vector<8x128xf32>, vector<128x256xf32>, vector<8x256xf32> -> vector<8x256xf32>
    %13 = vector.extract_strided_slice %11 {offsets = [0, 0], sizes = [8, 128], strides = [1, 1]} : vector<8x384xf32> to vector<8x128xf32>
    %14 = vector.extract_strided_slice %12 {offsets = [0, 0], sizes = [8, 128], strides = [1, 1]} : vector<8x256xf32> to vector<8x128xf32>
    %15 = arith.addf %13, %14 : vector<8x128xf32>
    %16 = arith.negf %15 : vector<8x128xf32>
    %17 = math.exp %16 : vector<8x128xf32>
    %cst_10 = arith.constant 1.000000e+00 : f32
    %18 = vector.broadcast %cst_10 : f32 to vector<8x128xf32>
    %19 = arith.addf %18, %17 : vector<8x128xf32>
    %20 = arith.divf %18, %19 : vector<8x128xf32>
    %21 = vector.extract_strided_slice %11 {offsets = [0, 128], sizes = [8, 128], strides = [1, 1]} : vector<8x384xf32> to vector<8x128xf32>
    %22 = vector.extract_strided_slice %12 {offsets = [0, 128], sizes = [8, 128], strides = [1, 1]} : vector<8x256xf32> to vector<8x128xf32>
    %23 = arith.addf %21, %22 : vector<8x128xf32>
    %24 = arith.negf %23 : vector<8x128xf32>
    %25 = math.exp %24 : vector<8x128xf32>
    %cst_11 = arith.constant 1.000000e+00 : f32
    %26 = vector.broadcast %cst_11 : f32 to vector<8x128xf32>
    %27 = arith.addf %26, %25 : vector<8x128xf32>
    %28 = arith.divf %26, %27 : vector<8x128xf32>
    %cst_12 = arith.constant dense<0.000000e+00> : vector<8x128xf32>
    %29 = tpu.matmul %8, %4, %cst_12 {dimension_numbers = #tpu.dot_dimension_numbers<[1], [0], [0], [1], [0, 0, 1, 1], [], []>} : vector<8x128xf32>, vector<128x128xf32>, vector<8x128xf32> -> vector<8x128xf32>
    %30 = vector.extract_strided_slice %11 {offsets = [0, 256], sizes = [8, 128], strides = [1, 1]} : vector<8x384xf32> to vector<8x128xf32>
    %31 = arith.addf %29, %7 : vector<8x128xf32>
    %32 = arith.mulf %20, %31 : vector<8x128xf32>
    %33 = arith.addf %30, %32 : vector<8x128xf32>
    %34 = math.tanh %33 : vector<8x128xf32>
    %35 = arith.subf %8, %34 : vector<8x128xf32>
    %36 = arith.mulf %28, %35 : vector<8x128xf32>
    %37 = arith.addf %34, %36 : vector<8x128xf32>
    %38 = arith.index_cast %c0_i32_7 : i32 to index
    %c0_13 = arith.constant 0 : index
    %c0_14 = arith.constant 0 : index
    %39 = vector.load %arg6[%38, %c0_13, %c0_14] : memref<8x8x128xf32, #tpu.memory_space<vmem>>, vector<1x8x128xf32>
    %40 = vector.shape_cast %39 : vector<1x8x128xf32> to vector<8x128xf32>
    %41 = vector.shape_cast %37 : vector<8x128xf32> to vector<1x8x128xf32>
    tpu.vector_store %arg6[%38, %c0_13, %c0_14], %41 {strides = array<i32>} : memref<8x8x128xf32, #tpu.memory_space<vmem>>, vector<1x8x128xf32>,
    %c1_i32 = arith.constant 1 : i32
    %42 = arith.index_cast %c1_i32 : i32 to index
    %c0_15 = arith.constant 0 : index
    %c0_16 = arith.constant 0 : index
    %43 = vector.load %arg2[%42, %c0_15, %c0_16] : memref<8x8x384xf32, #tpu.memory_space<vmem>>, vector<1x8x384xf32>
    %44 = vector.shape_cast %43 : vector<1x8x384xf32> to vector<8x384xf32>
    %cst_17 = arith.constant dense<0.000000e+00> : vector<8x256xf32>
    %45 = tpu.matmul %37, %3, %cst_17 {dimension_numbers = #tpu.dot_dimension_numbers<[1], [0], [0], [1], [0, 0, 1, 1], [], []>} : vector<8x128xf32>, vector<128x256xf32>, vector<8x256xf32> -> vector<8x256xf32>
    %46 = vector.extract_strided_slice %44 {offsets = [0, 0], sizes = [8, 128], strides = [1, 1]} : vector<8x384xf32> to vector<8x128xf32>
    %47 = vector.extract_strided_slice %45 {offsets = [0, 0], sizes = [8, 128], strides = [1, 1]} : vector<8x256xf32> to vector<8x128xf32>
    %48 = arith.addf %46, %47 : vector<8x128xf32>
    %49 = arith.negf %48 : vector<8x128xf32>
    %50 = math.exp %49 : vector<8x128xf32>
    %cst_18 = arith.constant 1.000000e+00 : f32
    %51 = vector.broadcast %cst_18 : f32 to vector<8x128xf32>
    %52 = arith.addf %51, %50 : vector<8x128xf32>
    %53 = arith.divf %51, %52 : vector<8x128xf32>
    %54 = vector.extract_strided_slice %44 {offsets = [0, 128], sizes = [8, 128], strides = [1, 1]} : vector<8x384xf32> to vector<8x128xf32>
    %55 = vector.extract_strided_slice %45 {offsets = [0, 128], sizes = [8, 128], strides = [1, 1]} : vector<8x256xf32> to vector<8x128xf32>
    %56 = arith.addf %54, %55 : vector<8x128xf32>
    %57 = arith.negf %56 : vector<8x128xf32>
    %58 = math.exp %57 : vector<8x128xf32>
    %cst_19 = arith.constant 1.000000e+00 : f32
    %59 = vector.broadcast %cst_19 : f32 to vector<8x128xf32>
    %60 = arith.addf %59, %58 : vector<8x128xf32>
    %61 = arith.divf %59, %60 : vector<8x128xf32>
    %cst_20 = arith.constant dense<0.000000e+00> : vector<8x128xf32>
    %62 = tpu.matmul %37, %4, %cst_20 {dimension_numbers = #tpu.dot_dimension_numbers<[1], [0], [0], [1], [0, 0, 1, 1], [], []>} : vector<8x128xf32>, vector<128x128xf32>, vector<8x128xf32> -> vector<8x128xf32>
    %63 = vector.extract_strided_slice %44 {offsets = [0, 256], sizes = [8, 128], strides = [1, 1]} : vector<8x384xf32> to vector<8x128xf32>
    %64 = arith.addf %62, %7 : vector<8x128xf32>
    %65 = arith.mulf %53, %64 : vector<8x128xf32>
    %66 = arith.addf %63, %65 : vector<8x128xf32>
    %67 = math.tanh %66 : vector<8x128xf32>
    %68 = arith.subf %37, %67 : vector<8x128xf32>
    %69 = arith.mulf %61, %68 : vector<8x128xf32>
    %70 = arith.addf %67, %69 : vector<8x128xf32>
    %71 = arith.index_cast %c1_i32 : i32 to index
    %c0_21 = arith.constant 0 : index
    %c0_22 = arith.constant 0 : index
    %72 = vector.load %arg6[%71, %c0_21, %c0_22] : memref<8x8x128xf32, #tpu.memory_space<vmem>>, vector<1x8x128xf32>
    %73 = vector.shape_cast %72 : vector<1x8x128xf32> to vector<8x128xf32>
    %74 = vector.shape_cast %70 : vector<8x128xf32> to vector<1x8x128xf32>
    tpu.vector_store %arg6[%71, %c0_21, %c0_22], %74 {strides = array<i32>} : memref<8x8x128xf32, #tpu.memory_space<vmem>>, vector<1x8x128xf32>,
    %c2_i32 = arith.constant 2 : i32
    %75 = arith.index_cast %c2_i32 : i32 to index
    %c0_23 = arith.constant 0 : index
    %c0_24 = arith.constant 0 : index
    %76 = vector.load %arg2[%75, %c0_23, %c0_24] : memref<8x8x384xf32, #tpu.memory_space<vmem>>, vector<1x8x384xf32>
    %77 = vector.shape_cast %76 : vector<1x8x384xf32> to vector<8x384xf32>
    %cst_25 = arith.constant dense<0.000000e+00> : vector<8x256xf32>
    %78 = tpu.matmul %70, %3, %cst_25 {dimension_numbers = #tpu.dot_dimension_numbers<[1], [0], [0], [1], [0, 0, 1, 1], [], []>} : vector<8x128xf32>, vector<128x256xf32>, vector<8x256xf32> -> vector<8x256xf32>
    %79 = vector.extract_strided_slice %77 {offsets = [0, 0], sizes = [8, 128], strides = [1, 1]} : vector<8x384xf32> to vector<8x128xf32>
    %80 = vector.extract_strided_slice %78 {offsets = [0, 0], sizes = [8, 128], strides = [1, 1]} : vector<8x256xf32> to vector<8x128xf32>
    %81 = arith.addf %79, %80 : vector<8x128xf32>
    %82 = arith.negf %81 : vector<8x128xf32>
    %83 = math.exp %82 : vector<8x128xf32>
    %cst_26 = arith.constant 1.000000e+00 : f32
    %84 = vector.broadcast %cst_26 : f32 to vector<8x128xf32>
    %85 = arith.addf %84, %83 : vector<8x128xf32>
    %86 = arith.divf %84, %85 : vector<8x128xf32>
    %87 = vector.extract_strided_slice %77 {offsets = [0, 128], sizes = [8, 128], strides = [1, 1]} : vector<8x384xf32> to vector<8x128xf32>
    %88 = vector.extract_strided_slice %78 {offsets = [0, 128], sizes = [8, 128], strides = [1, 1]} : vector<8x256xf32> to vector<8x128xf32>
    %89 = arith.addf %87, %88 : vector<8x128xf32>
    %90 = arith.negf %89 : vector<8x128xf32>
    %91 = math.exp %90 : vector<8x128xf32>
    %cst_27 = arith.constant 1.000000e+00 : f32
    %92 = vector.broadcast %cst_27 : f32 to vector<8x128xf32>
    %93 = arith.addf %92, %91 : vector<8x128xf32>
    %94 = arith.divf %92, %93 : vector<8x128xf32>
    %cst_28 = arith.constant dense<0.000000e+00> : vector<8x128xf32>
    %95 = tpu.matmul %70, %4, %cst_28 {dimension_numbers = #tpu.dot_dimension_numbers<[1], [0], [0], [1], [0, 0, 1, 1], [], []>} : vector<8x128xf32>, vector<128x128xf32>, vector<8x128xf32> -> vector<8x128xf32>
    %96 = vector.extract_strided_slice %77 {offsets = [0, 256], sizes = [8, 128], strides = [1, 1]} : vector<8x384xf32> to vector<8x128xf32>
    %97 = arith.addf %95, %7 : vector<8x128xf32>
    %98 = arith.mulf %86, %97 : vector<8x128xf32>
    %99 = arith.addf %96, %98 : vector<8x128xf32>
    %100 = math.tanh %99 : vector<8x128xf32>
    %101 = arith.subf %70, %100 : vector<8x128xf32>
    %102 = arith.mulf %94, %101 : vector<8x128xf32>
    %103 = arith.addf %100, %102 : vector<8x128xf32>
    %104 = arith.index_cast %c2_i32 : i32 to index
    %c0_29 = arith.constant 0 : index
    %c0_30 = arith.constant 0 : index
    %105 = vector.load %arg6[%104, %c0_29, %c0_30] : memref<8x8x128xf32, #tpu.memory_space<vmem>>, vector<1x8x128xf32>
    %106 = vector.shape_cast %105 : vector<1x8x128xf32> to vector<8x128xf32>
    %107 = vector.shape_cast %103 : vector<8x128xf32> to vector<1x8x128xf32>
    tpu.vector_store %arg6[%104, %c0_29, %c0_30], %107 {strides = array<i32>} : memref<8x8x128xf32, #tpu.memory_space<vmem>>, vector<1x8x128xf32>,
    %c3_i32 = arith.constant 3 : i32
    %108 = arith.index_cast %c3_i32 : i32 to index
    %c0_31 = arith.constant 0 : index
    %c0_32 = arith.constant 0 : index
    %109 = vector.load %arg2[%108, %c0_31, %c0_32] : memref<8x8x384xf32, #tpu.memory_space<vmem>>, vector<1x8x384xf32>
    %110 = vector.shape_cast %109 : vector<1x8x384xf32> to vector<8x384xf32>
    %cst_33 = arith.constant dense<0.000000e+00> : vector<8x256xf32>
    %111 = tpu.matmul %103, %3, %cst_33 {dimension_numbers = #tpu.dot_dimension_numbers<[1], [0], [0], [1], [0, 0, 1, 1], [], []>} : vector<8x128xf32>, vector<128x256xf32>, vector<8x256xf32> -> vector<8x256xf32>
    %112 = vector.extract_strided_slice %110 {offsets = [0, 0], sizes = [8, 128], strides = [1, 1]} : vector<8x384xf32> to vector<8x128xf32>
    %113 = vector.extract_strided_slice %111 {offsets = [0, 0], sizes = [8, 128], strides = [1, 1]} : vector<8x256xf32> to vector<8x128xf32>
    %114 = arith.addf %112, %113 : vector<8x128xf32>
    %115 = arith.negf %114 : vector<8x128xf32>
    %116 = math.exp %115 : vector<8x128xf32>
    %cst_34 = arith.constant 1.000000e+00 : f32
    %117 = vector.broadcast %cst_34 : f32 to vector<8x128xf32>
    %118 = arith.addf %117, %116 : vector<8x128xf32>
    %119 = arith.divf %117, %118 : vector<8x128xf32>
    %120 = vector.extract_strided_slice %110 {offsets = [0, 128], sizes = [8, 128], strides = [1, 1]} : vector<8x384xf32> to vector<8x128xf32>
    %121 = vector.extract_strided_slice %111 {offsets = [0, 128], sizes = [8, 128], strides = [1, 1]} : vector<8x256xf32> to vector<8x128xf32>
    %122 = arith.addf %120, %121 : vector<8x128xf32>
    %123 = arith.negf %122 : vector<8x128xf32>
    %124 = math.exp %123 : vector<8x128xf32>
    %cst_35 = arith.constant 1.000000e+00 : f32
    %125 = vector.broadcast %cst_35 : f32 to vector<8x128xf32>
    %126 = arith.addf %125, %124 : vector<8x128xf32>
    %127 = arith.divf %125, %126 : vector<8x128xf32>
    %cst_36 = arith.constant dense<0.000000e+00> : vector<8x128xf32>
    %128 = tpu.matmul %103, %4, %cst_36 {dimension_numbers = #tpu.dot_dimension_numbers<[1], [0], [0], [1], [0, 0, 1, 1], [], []>} : vector<8x128xf32>, vector<128x128xf32>, vector<8x128xf32> -> vector<8x128xf32>
    %129 = vector.extract_strided_slice %110 {offsets = [0, 256], sizes = [8, 128], strides = [1, 1]} : vector<8x384xf32> to vector<8x128xf32>
    %130 = arith.addf %128, %7 : vector<8x128xf32>
    %131 = arith.mulf %119, %130 : vector<8x128xf32>
    %132 = arith.addf %129, %131 : vector<8x128xf32>
    %133 = math.tanh %132 : vector<8x128xf32>
    %134 = arith.subf %103, %133 : vector<8x128xf32>
    %135 = arith.mulf %127, %134 : vector<8x128xf32>
    %136 = arith.addf %133, %135 : vector<8x128xf32>
    %137 = arith.index_cast %c3_i32 : i32 to index
    %c0_37 = arith.constant 0 : index
    %c0_38 = arith.constant 0 : index
    %138 = vector.load %arg6[%137, %c0_37, %c0_38] : memref<8x8x128xf32, #tpu.memory_space<vmem>>, vector<1x8x128xf32>
    %139 = vector.shape_cast %138 : vector<1x8x128xf32> to vector<8x128xf32>
    %140 = vector.shape_cast %136 : vector<8x128xf32> to vector<1x8x128xf32>
    tpu.vector_store %arg6[%137, %c0_37, %c0_38], %140 {strides = array<i32>} : memref<8x8x128xf32, #tpu.memory_space<vmem>>, vector<1x8x128xf32>,
    %c4_i32 = arith.constant 4 : i32
    %141 = arith.index_cast %c4_i32 : i32 to index
    %c0_39 = arith.constant 0 : index
    %c0_40 = arith.constant 0 : index
    %142 = vector.load %arg2[%141, %c0_39, %c0_40] : memref<8x8x384xf32, #tpu.memory_space<vmem>>, vector<1x8x384xf32>
    %143 = vector.shape_cast %142 : vector<1x8x384xf32> to vector<8x384xf32>
    %cst_41 = arith.constant dense<0.000000e+00> : vector<8x256xf32>
    %144 = tpu.matmul %136, %3, %cst_41 {dimension_numbers = #tpu.dot_dimension_numbers<[1], [0], [0], [1], [0, 0, 1, 1], [], []>} : vector<8x128xf32>, vector<128x256xf32>, vector<8x256xf32> -> vector<8x256xf32>
    %145 = vector.extract_strided_slice %143 {offsets = [0, 0], sizes = [8, 128], strides = [1, 1]} : vector<8x384xf32> to vector<8x128xf32>
    %146 = vector.extract_strided_slice %144 {offsets = [0, 0], sizes = [8, 128], strides = [1, 1]} : vector<8x256xf32> to vector<8x128xf32>
    %147 = arith.addf %145, %146 : vector<8x128xf32>
    %148 = arith.negf %147 : vector<8x128xf32>
    %149 = math.exp %148 : vector<8x128xf32>
    %cst_42 = arith.constant 1.000000e+00 : f32
    %150 = vector.broadcast %cst_42 : f32 to vector<8x128xf32>
    %151 = arith.addf %150, %149 : vector<8x128xf32>
    %152 = arith.divf %150, %151 : vector<8x128xf32>
    %153 = vector.extract_strided_slice %143 {offsets = [0, 128], sizes = [8, 128], strides = [1, 1]} : vector<8x384xf32> to vector<8x128xf32>
    %154 = vector.extract_strided_slice %144 {offsets = [0, 128], sizes = [8, 128], strides = [1, 1]} : vector<8x256xf32> to vector<8x128xf32>
    %155 = arith.addf %153, %154 : vector<8x128xf32>
    %156 = arith.negf %155 : vector<8x128xf32>
    %157 = math.exp %156 : vector<8x128xf32>
    %cst_43 = arith.constant 1.000000e+00 : f32
    %158 = vector.broadcast %cst_43 : f32 to vector<8x128xf32>
    %159 = arith.addf %158, %157 : vector<8x128xf32>
    %160 = arith.divf %158, %159 : vector<8x128xf32>
    %cst_44 = arith.constant dense<0.000000e+00> : vector<8x128xf32>
    %161 = tpu.matmul %136, %4, %cst_44 {dimension_numbers = #tpu.dot_dimension_numbers<[1], [0], [0], [1], [0, 0, 1, 1], [], []>} : vector<8x128xf32>, vector<128x128xf32>, vector<8x128xf32> -> vector<8x128xf32>
    %162 = vector.extract_strided_slice %143 {offsets = [0, 256], sizes = [8, 128], strides = [1, 1]} : vector<8x384xf32> to vector<8x128xf32>
    %163 = arith.addf %161, %7 : vector<8x128xf32>
    %164 = arith.mulf %152, %163 : vector<8x128xf32>
    %165 = arith.addf %162, %164 : vector<8x128xf32>
    %166 = math.tanh %165 : vector<8x128xf32>
    %167 = arith.subf %136, %166 : vector<8x128xf32>
    %168 = arith.mulf %160, %167 : vector<8x128xf32>
    %169 = arith.addf %166, %168 : vector<8x128xf32>
    %170 = arith.index_cast %c4_i32 : i32 to index
    %c0_45 = arith.constant 0 : index
    %c0_46 = arith.constant 0 : index
    %171 = vector.load %arg6[%170, %c0_45, %c0_46] : memref<8x8x128xf32, #tpu.memory_space<vmem>>, vector<1x8x128xf32>
    %172 = vector.shape_cast %171 : vector<1x8x128xf32> to vector<8x128xf32>
    %173 = vector.shape_cast %169 : vector<8x128xf32> to vector<1x8x128xf32>
    tpu.vector_store %arg6[%170, %c0_45, %c0_46], %173 {strides = array<i32>} : memref<8x8x128xf32, #tpu.memory_space<vmem>>, vector<1x8x128xf32>,
    %c5_i32 = arith.constant 5 : i32
    %174 = arith.index_cast %c5_i32 : i32 to index
    %c0_47 = arith.constant 0 : index
    %c0_48 = arith.constant 0 : index
    %175 = vector.load %arg2[%174, %c0_47, %c0_48] : memref<8x8x384xf32, #tpu.memory_space<vmem>>, vector<1x8x384xf32>
    %176 = vector.shape_cast %175 : vector<1x8x384xf32> to vector<8x384xf32>
    %cst_49 = arith.constant dense<0.000000e+00> : vector<8x256xf32>
    %177 = tpu.matmul %169, %3, %cst_49 {dimension_numbers = #tpu.dot_dimension_numbers<[1], [0], [0], [1], [0, 0, 1, 1], [], []>} : vector<8x128xf32>, vector<128x256xf32>, vector<8x256xf32> -> vector<8x256xf32>
    %178 = vector.extract_strided_slice %176 {offsets = [0, 0], sizes = [8, 128], strides = [1, 1]} : vector<8x384xf32> to vector<8x128xf32>
    %179 = vector.extract_strided_slice %177 {offsets = [0, 0], sizes = [8, 128], strides = [1, 1]} : vector<8x256xf32> to vector<8x128xf32>
    %180 = arith.addf %178, %179 : vector<8x128xf32>
    %181 = arith.negf %180 : vector<8x128xf32>
    %182 = math.exp %181 : vector<8x128xf32>
    %cst_50 = arith.constant 1.000000e+00 : f32
    %183 = vector.broadcast %cst_50 : f32 to vector<8x128xf32>
    %184 = arith.addf %183, %182 : vector<8x128xf32>
    %185 = arith.divf %183, %184 : vector<8x128xf32>
    %186 = vector.extract_strided_slice %176 {offsets = [0, 128], sizes = [8, 128], strides = [1, 1]} : vector<8x384xf32> to vector<8x128xf32>
    %187 = vector.extract_strided_slice %177 {offsets = [0, 128], sizes = [8, 128], strides = [1, 1]} : vector<8x256xf32> to vector<8x128xf32>
    %188 = arith.addf %186, %187 : vector<8x128xf32>
    %189 = arith.negf %188 : vector<8x128xf32>
    %190 = math.exp %189 : vector<8x128xf32>
    %cst_51 = arith.constant 1.000000e+00 : f32
    %191 = vector.broadcast %cst_51 : f32 to vector<8x128xf32>
    %192 = arith.addf %191, %190 : vector<8x128xf32>
    %193 = arith.divf %191, %192 : vector<8x128xf32>
    %cst_52 = arith.constant dense<0.000000e+00> : vector<8x128xf32>
    %194 = tpu.matmul %169, %4, %cst_52 {dimension_numbers = #tpu.dot_dimension_numbers<[1], [0], [0], [1], [0, 0, 1, 1], [], []>} : vector<8x128xf32>, vector<128x128xf32>, vector<8x128xf32> -> vector<8x128xf32>
    %195 = vector.extract_strided_slice %176 {offsets = [0, 256], sizes = [8, 128], strides = [1, 1]} : vector<8x384xf32> to vector<8x128xf32>
    %196 = arith.addf %194, %7 : vector<8x128xf32>
    %197 = arith.mulf %185, %196 : vector<8x128xf32>
    %198 = arith.addf %195, %197 : vector<8x128xf32>
    %199 = math.tanh %198 : vector<8x128xf32>
    %200 = arith.subf %169, %199 : vector<8x128xf32>
    %201 = arith.mulf %193, %200 : vector<8x128xf32>
    %202 = arith.addf %199, %201 : vector<8x128xf32>
    %203 = arith.index_cast %c5_i32 : i32 to index
    %c0_53 = arith.constant 0 : index
    %c0_54 = arith.constant 0 : index
    %204 = vector.load %arg6[%203, %c0_53, %c0_54] : memref<8x8x128xf32, #tpu.memory_space<vmem>>, vector<1x8x128xf32>
    %205 = vector.shape_cast %204 : vector<1x8x128xf32> to vector<8x128xf32>
    %206 = vector.shape_cast %202 : vector<8x128xf32> to vector<1x8x128xf32>
    tpu.vector_store %arg6[%203, %c0_53, %c0_54], %206 {strides = array<i32>} : memref<8x8x128xf32, #tpu.memory_space<vmem>>, vector<1x8x128xf32>,
    %c6_i32 = arith.constant 6 : i32
    %207 = arith.index_cast %c6_i32 : i32 to index
    %c0_55 = arith.constant 0 : index
    %c0_56 = arith.constant 0 : index
    %208 = vector.load %arg2[%207, %c0_55, %c0_56] : memref<8x8x384xf32, #tpu.memory_space<vmem>>, vector<1x8x384xf32>
    %209 = vector.shape_cast %208 : vector<1x8x384xf32> to vector<8x384xf32>
    %cst_57 = arith.constant dense<0.000000e+00> : vector<8x256xf32>
    %210 = tpu.matmul %202, %3, %cst_57 {dimension_numbers = #tpu.dot_dimension_numbers<[1], [0], [0], [1], [0, 0, 1, 1], [], []>} : vector<8x128xf32>, vector<128x256xf32>, vector<8x256xf32> -> vector<8x256xf32>
    %211 = vector.extract_strided_slice %209 {offsets = [0, 0], sizes = [8, 128], strides = [1, 1]} : vector<8x384xf32> to vector<8x128xf32>
    %212 = vector.extract_strided_slice %210 {offsets = [0, 0], sizes = [8, 128], strides = [1, 1]} : vector<8x256xf32> to vector<8x128xf32>
    %213 = arith.addf %211, %212 : vector<8x128xf32>
    %214 = arith.negf %213 : vector<8x128xf32>
    %215 = math.exp %214 : vector<8x128xf32>
    %cst_58 = arith.constant 1.000000e+00 : f32
    %216 = vector.broadcast %cst_58 : f32 to vector<8x128xf32>
    %217 = arith.addf %216, %215 : vector<8x128xf32>
    %218 = arith.divf %216, %217 : vector<8x128xf32>
    %219 = vector.extract_strided_slice %209 {offsets = [0, 128], sizes = [8, 128], strides = [1, 1]} : vector<8x384xf32> to vector<8x128xf32>
    %220 = vector.extract_strided_slice %210 {offsets = [0, 128], sizes = [8, 128], strides = [1, 1]} : vector<8x256xf32> to vector<8x128xf32>
    %221 = arith.addf %219, %220 : vector<8x128xf32>
    %222 = arith.negf %221 : vector<8x128xf32>
    %223 = math.exp %222 : vector<8x128xf32>
    %cst_59 = arith.constant 1.000000e+00 : f32
    %224 = vector.broadcast %cst_59 : f32 to vector<8x128xf32>
    %225 = arith.addf %224, %223 : vector<8x128xf32>
    %226 = arith.divf %224, %225 : vector<8x128xf32>
    %cst_60 = arith.constant dense<0.000000e+00> : vector<8x128xf32>
    %227 = tpu.matmul %202, %4, %cst_60 {dimension_numbers = #tpu.dot_dimension_numbers<[1], [0], [0], [1], [0, 0, 1, 1], [], []>} : vector<8x128xf32>, vector<128x128xf32>, vector<8x128xf32> -> vector<8x128xf32>
    %228 = vector.extract_strided_slice %209 {offsets = [0, 256], sizes = [8, 128], strides = [1, 1]} : vector<8x384xf32> to vector<8x128xf32>
    %229 = arith.addf %227, %7 : vector<8x128xf32>
    %230 = arith.mulf %218, %229 : vector<8x128xf32>
    %231 = arith.addf %228, %230 : vector<8x128xf32>
    %232 = math.tanh %231 : vector<8x128xf32>
    %233 = arith.subf %202, %232 : vector<8x128xf32>
    %234 = arith.mulf %226, %233 : vector<8x128xf32>
    %235 = arith.addf %232, %234 : vector<8x128xf32>
    %236 = arith.index_cast %c6_i32 : i32 to index
    %c0_61 = arith.constant 0 : index
    %c0_62 = arith.constant 0 : index
    %237 = vector.load %arg6[%236, %c0_61, %c0_62] : memref<8x8x128xf32, #tpu.memory_space<vmem>>, vector<1x8x128xf32>
    %238 = vector.shape_cast %237 : vector<1x8x128xf32> to vector<8x128xf32>
    %239 = vector.shape_cast %235 : vector<8x128xf32> to vector<1x8x128xf32>
    tpu.vector_store %arg6[%236, %c0_61, %c0_62], %239 {strides = array<i32>} : memref<8x8x128xf32, #tpu.memory_space<vmem>>, vector<1x8x128xf32>,
    %c7_i32 = arith.constant 7 : i32
    %240 = arith.index_cast %c7_i32 : i32 to index
    %c0_63 = arith.constant 0 : index
    %c0_64 = arith.constant 0 : index
    %241 = vector.load %arg2[%240, %c0_63, %c0_64] : memref<8x8x384xf32, #tpu.memory_space<vmem>>, vector<1x8x384xf32>
    %242 = vector.shape_cast %241 : vector<1x8x384xf32> to vector<8x384xf32>
    %cst_65 = arith.constant dense<0.000000e+00> : vector<8x256xf32>
    %243 = tpu.matmul %235, %3, %cst_65 {dimension_numbers = #tpu.dot_dimension_numbers<[1], [0], [0], [1], [0, 0, 1, 1], [], []>} : vector<8x128xf32>, vector<128x256xf32>, vector<8x256xf32> -> vector<8x256xf32>
    %244 = vector.extract_strided_slice %242 {offsets = [0, 0], sizes = [8, 128], strides = [1, 1]} : vector<8x384xf32> to vector<8x128xf32>
    %245 = vector.extract_strided_slice %243 {offsets = [0, 0], sizes = [8, 128], strides = [1, 1]} : vector<8x256xf32> to vector<8x128xf32>
    %246 = arith.addf %244, %245 : vector<8x128xf32>
    %247 = arith.negf %246 : vector<8x128xf32>
    %248 = math.exp %247 : vector<8x128xf32>
    %cst_66 = arith.constant 1.000000e+00 : f32
    %249 = vector.broadcast %cst_66 : f32 to vector<8x128xf32>
    %250 = arith.addf %249, %248 : vector<8x128xf32>
    %251 = arith.divf %249, %250 : vector<8x128xf32>
    %252 = vector.extract_strided_slice %242 {offsets = [0, 128], sizes = [8, 128], strides = [1, 1]} : vector<8x384xf32> to vector<8x128xf32>
    %253 = vector.extract_strided_slice %243 {offsets = [0, 128], sizes = [8, 128], strides = [1, 1]} : vector<8x256xf32> to vector<8x128xf32>
    %254 = arith.addf %252, %253 : vector<8x128xf32>
    %255 = arith.negf %254 : vector<8x128xf32>
    %256 = math.exp %255 : vector<8x128xf32>
    %cst_67 = arith.constant 1.000000e+00 : f32
    %257 = vector.broadcast %cst_67 : f32 to vector<8x128xf32>
    %258 = arith.addf %257, %256 : vector<8x128xf32>
    %259 = arith.divf %257, %258 : vector<8x128xf32>
    %cst_68 = arith.constant dense<0.000000e+00> : vector<8x128xf32>
    %260 = tpu.matmul %235, %4, %cst_68 {dimension_numbers = #tpu.dot_dimension_numbers<[1], [0], [0], [1], [0, 0, 1, 1], [], []>} : vector<8x128xf32>, vector<128x128xf32>, vector<8x128xf32> -> vector<8x128xf32>
    %261 = vector.extract_strided_slice %242 {offsets = [0, 256], sizes = [8, 128], strides = [1, 1]} : vector<8x384xf32> to vector<8x128xf32>
    %262 = arith.addf %260, %7 : vector<8x128xf32>
    %263 = arith.mulf %251, %262 : vector<8x128xf32>
    %264 = arith.addf %261, %263 : vector<8x128xf32>
    %265 = math.tanh %264 : vector<8x128xf32>
    %266 = arith.subf %235, %265 : vector<8x128xf32>
    %267 = arith.mulf %259, %266 : vector<8x128xf32>
    %268 = arith.addf %265, %267 : vector<8x128xf32>
    %269 = arith.index_cast %c7_i32 : i32 to index
    %c0_69 = arith.constant 0 : index
    %c0_70 = arith.constant 0 : index
    %270 = vector.load %arg6[%269, %c0_69, %c0_70] : memref<8x8x128xf32, #tpu.memory_space<vmem>>, vector<1x8x128xf32>
    %271 = vector.shape_cast %270 : vector<1x8x128xf32> to vector<8x128xf32>
    %272 = vector.shape_cast %268 : vector<8x128xf32> to vector<1x8x128xf32>
    tpu.vector_store %arg6[%269, %c0_69, %c0_70], %272 {strides = array<i32>} : memref<8x8x128xf32, #tpu.memory_space<vmem>>, vector<1x8x128xf32>,
    %c8_i32 = arith.constant 8 : i32
    %c0_71 = arith.constant 0 : index
    %c0_72 = arith.constant 0 : index
    %273 = vector.load %arg7[%c0_71, %c0_72] : memref<8x128xf32, #tpu.memory_space<vmem>>, vector<8x128xf32>
    tpu.vector_store %arg7[%c0_71, %c0_72], %268 {strides = array<i32>} : memref<8x128xf32, #tpu.memory_space<vmem>>, vector<8x128xf32>,
    return
  }
  func.func @transform_0(%arg0: i32, %arg1: i32) -> (i32, i32, i32) {
    %c0_i32 = arith.constant 0 : i32
    %c0_i32_0 = arith.constant 0 : i32
    return %arg1, %arg0, %c0_i32 : i32, i32, i32
  }
  func.func @transform_1(%arg0: i32, %arg1: i32) -> (i32, i32) {
    %c0_i32 = arith.constant 0 : i32
    %c0_i32_0 = arith.constant 0 : i32
    %c0_i32_1 = arith.constant 0 : i32
    return %c0_i32, %c0_i32_0 : i32, i32
  }
  func.func @transform_2(%arg0: i32, %arg1: i32) -> (i32, i32) {
    %c0_i32 = arith.constant 0 : i32
    %c0_i32_0 = arith.constant 0 : i32
    %c0_i32_1 = arith.constant 0 : i32
    return %c0_i32, %c0_i32_0 : i32, i32
  }
  func.func @transform_3(%arg0: i32, %arg1: i32) -> (i32, i32) {
    %c0_i32 = arith.constant 0 : i32
    %c0_i32_0 = arith.constant 0 : i32
    return %arg0, %c0_i32 : i32, i32
  }
  func.func @transform_4(%arg0: i32, %arg1: i32) -> (i32, i32, i32) {
    %c0_i32 = arith.constant 0 : i32
    %c0_i32_0 = arith.constant 0 : i32
    return %arg1, %arg0, %c0_i32 : i32, i32, i32
  }
}

</mosaic_0001>

<llo_original>
// kernel: tpu_custom_call.1
$region0: #{tpu_custom_call.1}
  #allocation0 [shape = 'u32[]', space=smem, size = 0x4, offset = 0x4, fixed_abs, tag = 'smem constant byte address 0x4 - core index']
  #allocation1 [shape = 'u32[72,128]{1,0:T(1,128)}', space=vmem, size = 0x9000, scoped, tag = 'internal scratch']
  #allocation2 [shape = 'f32[8,128]{1,0:T(8,128)}', space=vmem, size = 0x1000, scoped, tag = 'scratch operand']
  %s0 = inlined_call_operand.hbm [shape: f32[8,8,384], index: 0, kind: input, shape index: {}]
  %s1 = inlined_call_operand.hbm [shape: f32[128,384], index: 1, kind: input, shape index: {}]
  %s2 = inlined_call_operand.vmem [shape: f32[1,128], index: 2, kind: input, shape index: {}]
  %s3 = inlined_call_operand.hbm [shape: f32[8,128], index: 3, kind: input, shape index: {}]
  %s4 = inlined_call_operand.hbm [shape: f32[8,8,128], index: 4, kind: output, shape index: {}]
  %s5 = sld [smem:[#allocation0]]
  $region42: #{tpu_custom_call.1} parent=0
    _
  %s7 = ssub.s32 1, %s5
  %s8 = scalar_select 0, %s7, %s5
  $region1: #{tpu_custom_call.1} parent=0
    #allocation3 [shape = 'u8[98304]{0}', space=vmem, size = 0x18000, scoped, tag = 'input window, operand 0, single buffered']
    #allocation4 [shape = 's32[1]{0}', space=sflag, size = 0x4, scoped, tag = 'scoped memory for tpu_custom_call.1']
    #allocation5 [shape = 's32[1]{0}', space=sflag, size = 0x4, scoped, tag = 'scoped memory for tpu_custom_call.1']
    #allocation6 [shape = 'u8[196608]{0}', space=vmem, size = 0x30000, scoped, tag = 'input window, operand 1, single buffered']
    #allocation7 [shape = 's32[1]{0}', space=sflag, size = 0x4, scoped, tag = 'scoped memory for tpu_custom_call.1']
    #allocation8 [shape = 'u8[4096]{0}', space=vmem, size = 0x1000, scoped, tag = 'input window, operand 3, single buffered']
    #allocation9 [shape = 'u8[32768]{0}', space=vmem, size = 0x8000, scoped, tag = 'output window, operand 0, single buffered']
    %9 = vsyncpa [#allocation4], 0
    %10 = vsyncpa [#allocation7], 0
    %11 = vsyncpa [#allocation5], 0
    // Predicated region
    $region2: #{tpu_custom_call.1} parent=1 // pred_check
      _
    $region3: #{tpu_custom_call.1} parent=1 // pred_check_branch
      %13 = sbr.rel (0) target = $region5
    $region4: #{tpu_custom_call.1} parent=1 // pred_region
      %15 = vsyncadd [#allocation4], 0
      %s16 = sshll.u32 %s0, 4
      %s17 = int_to_ptr.hbm [resolvable:$true] %s16
      %s18 = sshll.u32 [#allocation3], 4
      %s19 = int_to_ptr.vmem [resolvable:$true] %s18
      %24 = dma.hbm_to_vmem [thread:$0]  %s17, 3072, %s19, [#allocation4], 384, 384, 24
    $region5: #{tpu_custom_call.1} parent=1 // pred_fallthru
      _
    // Predicated region
    $region6: #{tpu_custom_call.1} parent=1 // pred_check
      _
    $region7: #{tpu_custom_call.1} parent=1 // pred_check_branch
      %26 = sbr.rel (0) target = $region9
    $region8: #{tpu_custom_call.1} parent=1 // pred_region
      %28 = vsyncadd [#allocation7], 0
      %s29 = sshll.u32 %s1, 4
      %s30 = int_to_ptr.hbm [resolvable:$true] %s29
      %s31 = sshll.u32 [#allocation6], 4
      %s32 = int_to_ptr.vmem [resolvable:$true] %s31
      %37 = dma.hbm_to_vmem [thread:$0]  %s30, 6144, %s32, [#allocation7], 384, 384, 24
    $region9: #{tpu_custom_call.1} parent=1 // pred_fallthru
      _
    // Predicated region
    $region10: #{tpu_custom_call.1} parent=1 // pred_check
      _
    $region11: #{tpu_custom_call.1} parent=1 // pred_check_branch
      %39 = sbr.rel (0) target = $region13
    $region12: #{tpu_custom_call.1} parent=1 // pred_region
      _
    $region13: #{tpu_custom_call.1} parent=1 // pred_fallthru
      _
    // Predicated region
    $region14: #{tpu_custom_call.1} parent=1 // pred_check
      _
    $region15: #{tpu_custom_call.1} parent=1 // pred_check_branch
      %41 = sbr.rel (0) target = $region17
    $region16: #{tpu_custom_call.1} parent=1 // pred_region
      %43 = vsyncadd [#allocation7], 0
      %s45 = sshll.u32 %s3, 4
      %s46 = int_to_ptr.hbm [resolvable:$true] %s45
      %s47 = sshll.u32 [#allocation8], 4
      %s48 = int_to_ptr.vmem [resolvable:$true] %s47
      %50 = dma.hbm_to_vmem [thread:$0]  %s46, 128, %s48, [#allocation7]
    $region17: #{tpu_custom_call.1} parent=1 // pred_fallthru
      _
    // Predicated region
    $region18: #{tpu_custom_call.1} parent=1 // pred_check
      _
    $region19: #{tpu_custom_call.1} parent=1 // pred_check_branch
      %52 = sbr.rel (0) target = $region21
    $region20: #{tpu_custom_call.1} parent=1 // pred_region
      %54 = dma.done [#allocation4], 3072
    $region21: #{tpu_custom_call.1} parent=1 // pred_fallthru
      _
    // Predicated region
    $region22: #{tpu_custom_call.1} parent=1 // pred_check
      _
    $region23: #{tpu_custom_call.1} parent=1 // pred_check_branch
      %56 = sbr.rel (0) target = $region25
    $region24: #{tpu_custom_call.1} parent=1 // pred_region
      %58 = dma.done [#allocation7], 6144
    $region25: #{tpu_custom_call.1} parent=1 // pred_fallthru
      _
    // Predicated region
    $region26: #{tpu_custom_call.1} parent=1 // pred_check
      _
    $region27: #{tpu_custom_call.1} parent=1 // pred_check_branch
      %60 = sbr.rel (0) target = $region29
    $region28: #{tpu_custom_call.1} parent=1 // pred_region
      %62 = dma.done [#allocation7], 128
    $region29: #{tpu_custom_call.1} parent=1 // pred_fallthru
      _
    %p63 = scmp.eq.s32.totalorder 0, 0
    // Predicated region
    $region30: #{tpu_custom_call.1} parent=1 // pred_check
      %p64 = pneg %p63
    $region31: #{tpu_custom_call.1} parent=1 // pred_check_branch
      %66 = sbr.rel (%p64) target = $region33
    $region32: #{tpu_custom_call.1} parent=1 // pred_region
      %v67 = vld [vmem:[#allocation8] sm:$0xff]
      %68 = vst [vmem:[#allocation2] sm:$0xff] %v67
    $region33: #{tpu_custom_call.1} parent=1 // pred_fallthru
      _
    %v69 = vld [vmem:[#allocation6] sm:$0xff]
    %v70 = vld [vmem:[#allocation6 + $0x8] sm:$0xff]
    %v71 = vld [vmem:[#allocation6 + $0x18] sm:$0xff]
    %v72 = vld [vmem:[#allocation6 + $0x20] sm:$0xff]
    %v73 = vld [vmem:[#allocation6 + $0x30] sm:$0xff]
    %v74 = vld [vmem:[#allocation6 + $0x38] sm:$0xff]
    %v75 = vld [vmem:[#allocation6 + $0x48] sm:$0xff]
    %v76 = vld [vmem:[#allocation6 + $0x50] sm:$0xff]
    %v77 = vld [vmem:[#allocation6 + $0x60] sm:$0xff]
    %v78 = vld [vmem:[#allocation6 + $0x68] sm:$0xff]
    %v79 = vld [vmem:[#allocation6 + $0x78] sm:$0xff]
    %v80 = vld [vmem:[#allocation6 + $0x80] sm:$0xff]
    %v81 = vld [vmem:[#allocation6 + $0x90] sm:$0xff]
    %v82 = vld [vmem:[#allocation6 + $0x98] sm:$0xff]
    %v83 = vld [vmem:[#allocation6 + $0xa8] sm:$0xff]
    %v84 = vld [vmem:[#allocation6 + $0xb0] sm:$0xff]
    %v85 = vld [vmem:[#allocation6 + $0xc0] sm:$0xff]
    %v86 = vld [vmem:[#allocation6 + $0xc8] sm:$0xff]
    %v87 = vld [vmem:[#allocation6 + $0xd8] sm:$0xff]
    %v88 = vld [vmem:[#allocation6 + $0xe0] sm:$0xff]
    %v89 = vld [vmem:[#allocation6 + $0xf0] sm:$0xff]
    %v90 = vld [vmem:[#allocation6 + $0xf8] sm:$0xff]
    %v91 = vld [vmem:[#allocation6 + $0x108] sm:$0xff]
    %v92 = vld [vmem:[#allocation6 + $0x110] sm:$0xff]
    %v93 = vld [vmem:[#allocation6 + $0x120] sm:$0xff]
    %v94 = vld [vmem:[#allocation6 + $0x128] sm:$0xff]
    %v95 = vld [vmem:[#allocation6 + $0x138] sm:$0xff]
    %v96 = vld [vmem:[#allocation6 + $0x140] sm:$0xff]
    %v97 = vld [vmem:[#allocation6 + $0x150] sm:$0xff]
    %v98 = vld [vmem:[#allocation6 + $0x158] sm:$0xff]
    %v99 = vld [vmem:[#allocation6 + $0x168] sm:$0xff]
    %v100 = vld [vmem:[#allocation6 + $0x170] sm:$0xff]
    %v101 = vld [vmem:[#allocation6 + $0x10] sm:$0xff]
    %v102 = vld [vmem:[#allocation6 + $0x28] sm:$0xff]
    %v103 = vld [vmem:[#allocation6 + $0x40] sm:$0xff]
    %v104 = vld [vmem:[#allocation6 + $0x58] sm:$0xff]
    %v105 = vld [vmem:[#allocation6 + $0x70] sm:$0xff]
    %v106 = vld [vmem:[#allocation6 + $0x88] sm:$0xff]
    %v107 = vld [vmem:[#allocation6 + $0xa0] sm:$0xff]
    %v108 = vld [vmem:[#allocation6 + $0xb8] sm:$0xff]
    %v109 = vld [vmem:[#allocation6 + $0xd0] sm:$0xff]
    %v110 = vld [vmem:[#allocation6 + $0xe8] sm:$0xff]
    %v111 = vld [vmem:[#allocation6 + $0x100] sm:$0xff]
    %v112 = vld [vmem:[#allocation6 + $0x118] sm:$0xff]
    %v113 = vld [vmem:[#allocation6 + $0x130] sm:$0xff]
    %v114 = vld [vmem:[#allocation6 + $0x148] sm:$0xff]
    %v115 = vld [vmem:[#allocation6 + $0x160] sm:$0xff]
    %v116 = vld [vmem:[#allocation6 + $0x178] sm:$0xff]
    %v117 = vld [vmem:[%s2] sm:$0x1]
    %v119 = vperm.slane %v117, 0
    %v121 = vld [vmem:[#allocation2] sm:$0xff]
    %v122 = vld [vmem:[#allocation3] sm:$0xff]
    %v123 = vld [vmem:[#allocation3 + $0x8] sm:$0xff]
    %v124 = vld [vmem:[#allocation3 + $0x10] sm:$0xff]
    %125 = vmatpush.msra.mxu0 %v99
    %126 = vmatpush.msra.mxu0 %v97
    %127 = vmatpush.msra.mxu0 %v95
    %128 = vmatpush.msra.mxu0 %v93
    %129 = vmatpush.msra.mxu0 %v91
    %130 = vmatpush.msra.mxu0 %v89
    %131 = vmatpush.msra.mxu0 %v87
    %132 = vmatpush.msra.mxu0 %v85
    %133 = vmatpush.msra.mxu0 %v83
    %134 = vmatpush.msra.mxu0 %v81
    %135 = vmatpush.msra.mxu0 %v79
    %136 = vmatpush.msra.mxu0 %v77
    %137 = vmatpush.msra.mxu0 %v75
    %138 = vmatpush.msra.mxu0 %v73
    %139 = vmatpush.msra.mxu0 %v71
    %140 = vmatpush.msra.mxu0 %v69
    %141 = vmatmul.f32.gmra.mxu0 %v121
    %v142 = vpop.f32.mrf.mxu0
    %v143 = vadd.f32 0.0, %v142
    %144 = vdwg.mxu0
    %145 = vmatpush.msra.mxu0 %v100
    %146 = vmatpush.msra.mxu0 %v98
    %147 = vmatpush.msra.mxu0 %v96
    %148 = vmatpush.msra.mxu0 %v94
    %149 = vmatpush.msra.mxu0 %v92
    %150 = vmatpush.msra.mxu0 %v90
    %151 = vmatpush.msra.mxu0 %v88
    %152 = vmatpush.msra.mxu0 %v86
    %153 = vmatpush.msra.mxu0 %v84
    %154 = vmatpush.msra.mxu0 %v82
    %155 = vmatpush.msra.mxu0 %v80
    %156 = vmatpush.msra.mxu0 %v78
    %157 = vmatpush.msra.mxu0 %v76
    %158 = vmatpush.msra.mxu0 %v74
    %159 = vmatpush.msra.mxu0 %v72
    %160 = vmatpush.msra.mxu0 %v70
    %161 = vmatmul.f32.gmra.mxu0 %v121
    %v162 = vpop.f32.mrf.mxu0
    %v163 = vadd.f32 0.0, %v162
    %164 = vdwg.mxu0
    %v165 = vadd.f32 %v122, %v143
    %v166 = vxor.u32 %v165, 2147483648
    %v167 = vmul.f32 %v166, 1.442695
    %v168 = vpow.pop %v167
    %v169 = vadd.f32 %v168, 1.0
    %v170 = vrcp.pop %v169
    %v171 = vmul.f32 %v169, %v170
    %v172 = vsub.f32 1.0, %v171
    %v173 = vmul.f32 %v170, %v172
    %v174 = vadd.f32 %v170, %v173
    %vm175 = vweird.f32 %v169
    %vm176 = vweird.f32 %v170
    %vm177 = vmor %vm175, %vm176
    %v178 = vsel %vm177, %v170, %v174
    %v179 = vand.u32 2147483647, %v169
    %vm180 = vcmp.eq.f32.partialorder %v179, 8.507059e+37
    %v181 = vand.u32 %v169, 2147483648
    %v182 = vor.u32 1.1754944e-38, %v181
    %v183 = vsel %vm180, %v182, %v178
    %v184 = vmul.f32 1.0, %v183
    %v185 = vadd.f32 %v123, %v163
    %v186 = vxor.u32 %v185, 2147483648
    %v187 = vmul.f32 %v186, 1.442695
    %v188 = vpow.pop %v187
    %v189 = vadd.f32 %v188, 1.0
    %v190 = vrcp.pop %v189
    %v191 = vmul.f32 %v189, %v190
    %v192 = vsub.f32 1.0, %v191
    %v193 = vmul.f32 %v190, %v192
    %v194 = vadd.f32 %v190, %v193
    %vm195 = vweird.f32 %v189
    %vm196 = vweird.f32 %v190
    %vm197 = vmor %vm195, %vm196
    %v198 = vsel %vm197, %v190, %v194
    %v199 = vand.u32 2147483647, %v189
    %vm200 = vcmp.eq.f32.partialorder %v199, 8.507059e+37
    %v201 = vand.u32 %v189, 2147483648
    %v202 = vor.u32 1.1754944e-38, %v201
    %v203 = vsel %vm200, %v202, %v198
    %v204 = vmul.f32 1.0, %v203
    %205 = vmatpush.msra.mxu0 %v116
    %206 = vmatpush.msra.mxu0 %v115
    %207 = vmatpush.msra.mxu0 %v114
    %208 = vmatpush.msra.mxu0 %v113
    %209 = vmatpush.msra.mxu0 %v112
    %210 = vmatpush.msra.mxu0 %v111
    %211 = vmatpush.msra.mxu0 %v110
    %212 = vmatpush.msra.mxu0 %v109
    %213 = vmatpush.msra.mxu0 %v108
    %214 = vmatpush.msra.mxu0 %v107
    %215 = vmatpush.msra.mxu0 %v106
    %216 = vmatpush.msra.mxu0 %v105
    %217 = vmatpush.msra.mxu0 %v104
    %218 = vmatpush.msra.mxu0 %v103
    %219 = vmatpush.msra.mxu0 %v102
    %220 = vmatpush.msra.mxu0 %v101
    %221 = vmatmul.f32.gmra.mxu0 %v121
    %v222 = vpop.f32.mrf.mxu0
    %v223 = vadd.f32 %v119, %v222
    %224 = vdwg.mxu0
    %v225 = vmul.f32 %v184, %v223
    %v226 = vadd.f32 %v124, %v225
    %v227 = vtanh.pop %v226
    %v228 = vsub.f32 %v121, %v227
    %v229 = vmul.f32 %v204, %v228
    %v230 = vadd.f32 %v227, %v229
    %231 = vst [vmem:[#allocation9] sm:$0xff] %v230
    %s232 = scalar_lea.vmem [#allocation3], 24
    %v233 = vld [vmem:[%s232] sm:$0xff]
    %v234 = vld [vmem:[%s232 + $0x8] sm:$0xff]
    %v235 = vld [vmem:[%s232 + $0x10] sm:$0xff]
    %236 = vmatpush.msra.mxu0 %v99
    %237 = vmatpush.msra.mxu0 %v97
    %238 = vmatpush.msra.mxu0 %v95
    %239 = vmatpush.msra.mxu0 %v93
    %240 = vmatpush.msra.mxu0 %v91
    %241 = vmatpush.msra.mxu0 %v89
    %242 = vmatpush.msra.mxu0 %v87
    %243 = vmatpush.msra.mxu0 %v85
    %244 = vmatpush.msra.mxu0 %v83
    %245 = vmatpush.msra.mxu0 %v81
    %246 = vmatpush.msra.mxu0 %v79
    %247 = vmatpush.msra.mxu0 %v77
    %248 = vmatpush.msra.mxu0 %v75
    %249 = vmatpush.msra.mxu0 %v73
    %250 = vmatpush.msra.mxu0 %v71
    %251 = vmatpush.msra.mxu0 %v69
    %252 = vmatmul.f32.gmra.mxu0 %v230
    %v253 = vpop.f32.mrf.mxu0
    %v254 = vadd.f32 0.0, %v253
    %255 = vdwg.mxu0
    %256 = vmatpush.msra.mxu0 %v100
    %257 = vmatpush.msra.mxu0 %v98
    %258 = vmatpush.msra.mxu0 %v96
    %259 = vmatpush.msra.mxu0 %v94
    %260 = vmatpush.msra.mxu0 %v92
    %261 = vmatpush.msra.mxu0 %v90
    %262 = vmatpush.msra.mxu0 %v88
    %263 = vmatpush.msra.mxu0 %v86
    %264 = vmatpush.msra.mxu0 %v84
    %265 = vmatpush.msra.mxu0 %v82
    %266 = vmatpush.msra.mxu0 %v80
    %267 = vmatpush.msra.mxu0 %v78
    %268 = vmatpush.msra.mxu0 %v76
    %269 = vmatpush.msra.mxu0 %v74
    %270 = vmatpush.msra.mxu0 %v72
    %271 = vmatpush.msra.mxu0 %v70
    %272 = vmatmul.f32.gmra.mxu0 %v230
    %v273 = vpop.f32.mrf.mxu0
    %v274 = vadd.f32 0.0, %v273
    %275 = vdwg.mxu0
    %v276 = vadd.f32 %v233, %v254
    %v277 = vxor.u32 %v276, 2147483648
    %v278 = vmul.f32 %v277, 1.442695
    %v279 = vpow.pop %v278
    %v280 = vadd.f32 %v279, 1.0
    %v281 = vrcp.pop %v280
    %v282 = vmul.f32 %v280, %v281
    %v283 = vsub.f32 1.0, %v282
    %v284 = vmul.f32 %v281, %v283
    %v285 = vadd.f32 %v281, %v284
    %vm286 = vweird.f32 %v280
    %vm287 = vweird.f32 %v281
    %vm288 = vmor %vm286, %vm287
    %v289 = vsel %vm288, %v281, %v285
    %v290 = vand.u32 2147483647, %v280
    %vm291 = vcmp.eq.f32.partialorder %v290, 8.507059e+37
    %v292 = vand.u32 %v280, 2147483648
    %v293 = vor.u32 1.1754944e-38, %v292
    %v294 = vsel %vm291, %v293, %v289
    %v295 = vmul.f32 1.0, %v294
    %v296 = vadd.f32 %v234, %v274
    %v297 = vxor.u32 %v296, 2147483648
    %v298 = vmul.f32 %v297, 1.442695
    %v299 = vpow.pop %v298
    %v300 = vadd.f32 %v299, 1.0
    %v301 = vrcp.pop %v300
    %v302 = vmul.f32 %v300, %v301
    %v303 = vsub.f32 1.0, %v302
    %v304 = vmul.f32 %v301, %v303
    %v305 = vadd.f32 %v301, %v304
    %vm306 = vweird.f32 %v300
    %vm307 = vweird.f32 %v301
    %vm308 = vmor %vm306, %vm307
    %v309 = vsel %vm308, %v301, %v305
    %v310 = vand.u32 2147483647, %v300
    %vm311 = vcmp.eq.f32.partialorder %v310, 8.507059e+37
    %v312 = vand.u32 %v300, 2147483648
    %v313 = vor.u32 1.1754944e-38, %v312
    %v314 = vsel %vm311, %v313, %v309
    %v315 = vmul.f32 1.0, %v314
    %316 = vmatpush.msra.mxu0 %v116
    %317 = vmatpush.msra.mxu0 %v115
    %318 = vmatpush.msra.mxu0 %v114
    %319 = vmatpush.msra.mxu0 %v113
    %320 = vmatpush.msra.mxu0 %v112
    %321 = vmatpush.msra.mxu0 %v111
    %322 = vmatpush.msra.mxu0 %v110
    %323 = vmatpush.msra.mxu0 %v109
    %324 = vmatpush.msra.mxu0 %v108
    %325 = vmatpush.msra.mxu0 %v107
    %326 = vmatpush.msra.mxu0 %v106
    %327 = vmatpush.msra.mxu0 %v105
    %328 = vmatpush.msra.mxu0 %v104
    %329 = vmatpush.msra.mxu0 %v103
    %330 = vmatpush.msra.mxu0 %v102
    %331 = vmatpush.msra.mxu0 %v101
    %332 = vmatmul.f32.gmra.mxu0 %v230
    %v333 = vpop.f32.mrf.mxu0
    %v334 = vadd.f32 %v119, %v333
    %335 = vdwg.mxu0
    %v336 = vmul.f32 %v295, %v334
    %v337 = vadd.f32 %v235, %v336
    %v338 = vtanh.pop %v337
    %v339 = vsub.f32 %v230, %v338
    %v340 = vmul.f32 %v315, %v339
    %v341 = vadd.f32 %v338, %v340
    %s342 = scalar_lea.vmem [#allocation9], 8
    %343 = vst [vmem:[%s342] sm:$0xff] %v341
    %s344 = scalar_lea.vmem [#allocation3], 48
    %v345 = vld [vmem:[%s344] sm:$0xff]
    %v346 = vld [vmem:[%s344 + $0x8] sm:$0xff]
    %v347 = vld [vmem:[%s344 + $0x10] sm:$0xff]
    %348 = vmatpush.msra.mxu0 %v99
    %349 = vmatpush.msra.mxu0 %v97
    %350 = vmatpush.msra.mxu0 %v95
    %351 = vmatpush.msra.mxu0 %v93
    %352 = vmatpush.msra.mxu0 %v91
    %353 = vmatpush.msra.mxu0 %v89
    %354 = vmatpush.msra.mxu0 %v87
    %355 = vmatpush.msra.mxu0 %v85
    %356 = vmatpush.msra.mxu0 %v83
    %357 = vmatpush.msra.mxu0 %v81
    %358 = vmatpush.msra.mxu0 %v79
    %359 = vmatpush.msra.mxu0 %v77
    %360 = vmatpush.msra.mxu0 %v75
    %361 = vmatpush.msra.mxu0 %v73
    %362 = vmatpush.msra.mxu0 %v71
    %363 = vmatpush.msra.mxu0 %v69
    %364 = vmatmul.f32.gmra.mxu0 %v341
    %v365 = vpop.f32.mrf.mxu0
    %v366 = vadd.f32 0.0, %v365
    %367 = vdwg.mxu0
    %368 = vmatpush.msra.mxu0 %v100
    %369 = vmatpush.msra.mxu0 %v98
    %370 = vmatpush.msra.mxu0 %v96
    %371 = vmatpush.msra.mxu0 %v94
    %372 = vmatpush.msra.mxu0 %v92
    %373 = vmatpush.msra.mxu0 %v90
    %374 = vmatpush.msra.mxu0 %v88
    %375 = vmatpush.msra.mxu0 %v86
    %376 = vmatpush.msra.mxu0 %v84
    %377 = vmatpush.msra.mxu0 %v82
    %378 = vmatpush.msra.mxu0 %v80
    %379 = vmatpush.msra.mxu0 %v78
    %380 = vmatpush.msra.mxu0 %v76
    %381 = vmatpush.msra.mxu0 %v74
    %382 = vmatpush.msra.mxu0 %v72
    %383 = vmatpush.msra.mxu0 %v70
    %384 = vmatmul.f32.gmra.mxu0 %v341
    %v385 = vpop.f32.mrf.mxu0
    %v386 = vadd.f32 0.0, %v385
    %387 = vdwg.mxu0
    %v388 = vadd.f32 %v345, %v366
    %v389 = vxor.u32 %v388, 2147483648
    %v390 = vmul.f32 %v389, 1.442695
    %v391 = vpow.pop %v390
    %v392 = vadd.f32 %v391, 1.0
    %v393 = vrcp.pop %v392
    %v394 = vmul.f32 %v392, %v393
    %v395 = vsub.f32 1.0, %v394
    %v396 = vmul.f32 %v393, %v395
    %v397 = vadd.f32 %v393, %v396
    %vm398 = vweird.f32 %v392
    %vm399 = vweird.f32 %v393
    %vm400 = vmor %vm398, %vm399
    %v401 = vsel %vm400, %v393, %v397
    %v402 = vand.u32 2147483647, %v392
    %vm403 = vcmp.eq.f32.partialorder %v402, 8.507059e+37
    %v404 = vand.u32 %v392, 2147483648
    %v405 = vor.u32 1.1754944e-38, %v404
    %v406 = vsel %vm403, %v405, %v401
    %v407 = vmul.f32 1.0, %v406
    %v408 = vadd.f32 %v346, %v386
    %v409 = vxor.u32 %v408, 2147483648
    %v410 = vmul.f32 %v409, 1.442695
    %v411 = vpow.pop %v410
    %v412 = vadd.f32 %v411, 1.0
    %v413 = vrcp.pop %v412
    %v414 = vmul.f32 %v412, %v413
    %v415 = vsub.f32 1.0, %v414
    %v416 = vmul.f32 %v413, %v415
    %v417 = vadd.f32 %v413, %v416
    %vm418 = vweird.f32 %v412
    %vm419 = vweird.f32 %v413
    %vm420 = vmor %vm418, %vm419
    %v421 = vsel %vm420, %v413, %v417
    %v422 = vand.u32 2147483647, %v412
    %vm423 = vcmp.eq.f32.partialorder %v422, 8.507059e+37
    %v424 = vand.u32 %v412, 2147483648
    %v425 = vor.u32 1.1754944e-38, %v424
    %v426 = vsel %vm423, %v425, %v421
    %v427 = vmul.f32 1.0, %v426
    %428 = vmatpush.msra.mxu0 %v116
    %429 = vmatpush.msra.mxu0 %v115
    %430 = vmatpush.msra.mxu0 %v114
    %431 = vmatpush.msra.mxu0 %v113
    %432 = vmatpush.msra.mxu0 %v112
    %433 = vmatpush.msra.mxu0 %v111
    %434 = vmatpush.msra.mxu0 %v110
    %435 = vmatpush.msra.mxu0 %v109
    %436 = vmatpush.msra.mxu0 %v108
    %437 = vmatpush.msra.mxu0 %v107
    %438 = vmatpush.msra.mxu0 %v106
    %439 = vmatpush.msra.mxu0 %v105
    %440 = vmatpush.msra.mxu0 %v104
    %441 = vmatpush.msra.mxu0 %v103
    %442 = vmatpush.msra.mxu0 %v102
    %443 = vmatpush.msra.mxu0 %v101
    %444 = vmatmul.f32.gmra.mxu0 %v341
    %v445 = vpop.f32.mrf.mxu0
    %v446 = vadd.f32 %v119, %v445
    %447 = vdwg.mxu0
    %v448 = vmul.f32 %v407, %v446
    %v449 = vadd.f32 %v347, %v448
    %v450 = vtanh.pop %v449
    %v451 = vsub.f32 %v341, %v450
    %v452 = vmul.f32 %v427, %v451
    %v453 = vadd.f32 %v450, %v452
    %s454 = scalar_lea.vmem [#allocation9], 16
    %455 = vst [vmem:[%s454] sm:$0xff] %v453
    %s456 = scalar_lea.vmem [#allocation3], 72
    %v457 = vld [vmem:[%s456] sm:$0xff]
    %v458 = vld [vmem:[%s456 + $0x8] sm:$0xff]
    %v459 = vld [vmem:[%s456 + $0x10] sm:$0xff]
    %460 = vmatpush.msra.mxu0 %v99
    %461 = vmatpush.msra.mxu0 %v97
    %462 = vmatpush.msra.mxu0 %v95
    %463 = vmatpush.msra.mxu0 %v93
    %464 = vmatpush.msra.mxu0 %v91
    %465 = vmatpush.msra.mxu0 %v89
    %466 = vmatpush.msra.mxu0 %v87
    %467 = vmatpush.msra.mxu0 %v85
    %468 = vmatpush.msra.mxu0 %v83
    %469 = vmatpush.msra.mxu0 %v81
    %470 = vmatpush.msra.mxu0 %v79
    %471 = vmatpush.msra.mxu0 %v77
    %472 = vmatpush.msra.mxu0 %v75
    %473 = vmatpush.msra.mxu0 %v73
    %474 = vmatpush.msra.mxu0 %v71
    %475 = vmatpush.msra.mxu0 %v69
    %476 = vmatmul.f32.gmra.mxu0 %v453
    %v477 = vpop.f32.mrf.mxu0
    %v478 = vadd.f32 0.0, %v477
    %479 = vdwg.mxu0
    %480 = vmatpush.msra.mxu0 %v100
    %481 = vmatpush.msra.mxu0 %v98
    %482 = vmatpush.msra.mxu0 %v96
    %483 = vmatpush.msra.mxu0 %v94
    %484 = vmatpush.msra.mxu0 %v92
    %485 = vmatpush.msra.mxu0 %v90
    %486 = vmatpush.msra.mxu0 %v88
    %487 = vmatpush.msra.mxu0 %v86
    %488 = vmatpush.msra.mxu0 %v84
    %489 = vmatpush.msra.mxu0 %v82
    %490 = vmatpush.msra.mxu0 %v80
    %491 = vmatpush.msra.mxu0 %v78
    %492 = vmatpush.msra.mxu0 %v76
    %493 = vmatpush.msra.mxu0 %v74
    %494 = vmatpush.msra.mxu0 %v72
    %495 = vmatpush.msra.mxu0 %v70
    %496 = vmatmul.f32.gmra.mxu0 %v453
    %v497 = vpop.f32.mrf.mxu0
    %v498 = vadd.f32 0.0, %v497
    %499 = vdwg.mxu0
    %v500 = vadd.f32 %v457, %v478
    %v501 = vxor.u32 %v500, 2147483648
    %v502 = vmul.f32 %v501, 1.442695
    %v503 = vpow.pop %v502
    %v504 = vadd.f32 %v503, 1.0
    %v505 = vrcp.pop %v504
    %v506 = vmul.f32 %v504, %v505
    %v507 = vsub.f32 1.0, %v506
    %v508 = vmul.f32 %v505, %v507
    %v509 = vadd.f32 %v505, %v508
    %vm510 = vweird.f32 %v504
    %vm511 = vweird.f32 %v505
    %vm512 = vmor %vm510, %vm511
    %v513 = vsel %vm512, %v505, %v509
    %v514 = vand.u32 2147483647, %v504
    %vm515 = vcmp.eq.f32.partialorder %v514, 8.507059e+37
    %v516 = vand.u32 %v504, 2147483648
    %v517 = vor.u32 1.1754944e-38, %v516
    %v518 = vsel %vm515, %v517, %v513
    %v519 = vmul.f32 1.0, %v518
    %v520 = vadd.f32 %v458, %v498
    %v521 = vxor.u32 %v520, 2147483648
    %v522 = vmul.f32 %v521, 1.442695
    %v523 = vpow.pop %v522
    %v524 = vadd.f32 %v523, 1.0
    %v525 = vrcp.pop %v524
    %v526 = vmul.f32 %v524, %v525
    %v527 = vsub.f32 1.0, %v526
    %v528 = vmul.f32 %v525, %v527
    %v529 = vadd.f32 %v525, %v528
    %vm530 = vweird.f32 %v524
    %vm531 = vweird.f32 %v525
    %vm532 = vmor %vm530, %vm531
    %v533 = vsel %vm532, %v525, %v529
    %v534 = vand.u32 2147483647, %v524
    %vm535 = vcmp.eq.f32.partialorder %v534, 8.507059e+37
    %v536 = vand.u32 %v524, 2147483648
    %v537 = vor.u32 1.1754944e-38, %v536
    %v538 = vsel %vm535, %v537, %v533
    %v539 = vmul.f32 1.0, %v538
    %540 = vmatpush.msra.mxu0 %v116
    %541 = vmatpush.msra.mxu0 %v115
    %542 = vmatpush.msra.mxu0 %v114
    %543 = vmatpush.msra.mxu0 %v113
    %544 = vmatpush.msra.mxu0 %v112
    %545 = vmatpush.msra.mxu0 %v111
    %546 = vmatpush.msra.mxu0 %v110
    %547 = vmatpush.msra.mxu0 %v109
    %548 = vmatpush.msra.mxu0 %v108
    %549 = vmatpush.msra.mxu0 %v107
    %550 = vmatpush.msra.mxu0 %v106
    %551 = vmatpush.msra.mxu0 %v105
    %552 = vmatpush.msra.mxu0 %v104
    %553 = vmatpush.msra.mxu0 %v103
    %554 = vmatpush.msra.mxu0 %v102
    %555 = vmatpush.msra.mxu0 %v101
    %556 = vmatmul.f32.gmra.mxu0 %v453
    %v557 = vpop.f32.mrf.mxu0
    %v558 = vadd.f32 %v119, %v557
    %559 = vdwg.mxu0
    %v560 = vmul.f32 %v519, %v558
    %v561 = vadd.f32 %v459, %v560
    %v562 = vtanh.pop %v561
    %v563 = vsub.f32 %v453, %v562
    %v564 = vmul.f32 %v539, %v563
    %v565 = vadd.f32 %v562, %v564
    %s566 = scalar_lea.vmem [#allocation9], 24
    %567 = vst [vmem:[%s566] sm:$0xff] %v565
    %s568 = scalar_lea.vmem [#allocation3], 96
    %v569 = vld [vmem:[%s568] sm:$0xff]
    %v570 = vld [vmem:[%s568 + $0x8] sm:$0xff]
    %v571 = vld [vmem:[%s568 + $0x10] sm:$0xff]
    %572 = vmatpush.msra.mxu0 %v99
    %573 = vmatpush.msra.mxu0 %v97
    %574 = vmatpush.msra.mxu0 %v95
    %575 = vmatpush.msra.mxu0 %v93
    %576 = vmatpush.msra.mxu0 %v91
    %577 = vmatpush.msra.mxu0 %v89
    %578 = vmatpush.msra.mxu0 %v87
    %579 = vmatpush.msra.mxu0 %v85
    %580 = vmatpush.msra.mxu0 %v83
    %581 = vmatpush.msra.mxu0 %v81
    %582 = vmatpush.msra.mxu0 %v79
    %583 = vmatpush.msra.mxu0 %v77
    %584 = vmatpush.msra.mxu0 %v75
    %585 = vmatpush.msra.mxu0 %v73
    %586 = vmatpush.msra.mxu0 %v71
    %587 = vmatpush.msra.mxu0 %v69
    %588 = vmatmul.f32.gmra.mxu0 %v565
    %v589 = vpop.f32.mrf.mxu0
    %v590 = vadd.f32 0.0, %v589
    %591 = vdwg.mxu0
    %592 = vmatpush.msra.mxu0 %v100
    %593 = vmatpush.msra.mxu0 %v98
    %594 = vmatpush.msra.mxu0 %v96
    %595 = vmatpush.msra.mxu0 %v94
    %596 = vmatpush.msra.mxu0 %v92
    %597 = vmatpush.msra.mxu0 %v90
    %598 = vmatpush.msra.mxu0 %v88
    %599 = vmatpush.msra.mxu0 %v86
    %600 = vmatpush.msra.mxu0 %v84
    %601 = vmatpush.msra.mxu0 %v82
    %602 = vmatpush.msra.mxu0 %v80
    %603 = vmatpush.msra.mxu0 %v78
    %604 = vmatpush.msra.mxu0 %v76
    %605 = vmatpush.msra.mxu0 %v74
    %606 = vmatpush.msra.mxu0 %v72
    %607 = vmatpush.msra.mxu0 %v70
    %608 = vmatmul.f32.gmra.mxu0 %v565
    %v609 = vpop.f32.mrf.mxu0
    %v610 = vadd.f32 0.0, %v609
    %611 = vdwg.mxu0
    %v612 = vadd.f32 %v569, %v590
    %v613 = vxor.u32 %v612, 2147483648
    %v614 = vmul.f32 %v613, 1.442695
    %v615 = vpow.pop %v614
    %v616 = vadd.f32 %v615, 1.0
    %v617 = vrcp.pop %v616
    %v618 = vmul.f32 %v616, %v617
    %v619 = vsub.f32 1.0, %v618
    %v620 = vmul.f32 %v617, %v619
    %v621 = vadd.f32 %v617, %v620
    %vm622 = vweird.f32 %v616
    %vm623 = vweird.f32 %v617
    %vm624 = vmor %vm622, %vm623
    %v625 = vsel %vm624, %v617, %v621
    %v626 = vand.u32 2147483647, %v616
    %vm627 = vcmp.eq.f32.partialorder %v626, 8.507059e+37
    %v628 = vand.u32 %v616, 2147483648
    %v629 = vor.u32 1.1754944e-38, %v628
    %v630 = vsel %vm627, %v629, %v625
    %v631 = vmul.f32 1.0, %v630
    %v632 = vadd.f32 %v570, %v610
    %v633 = vxor.u32 %v632, 2147483648
    %v634 = vmul.f32 %v633, 1.442695
    %v635 = vpow.pop %v634
    %v636 = vadd.f32 %v635, 1.0
    %v637 = vrcp.pop %v636
    %v638 = vmul.f32 %v636, %v637
    %v639 = vsub.f32 1.0, %v638
    %v640 = vmul.f32 %v637, %v639
    %v641 = vadd.f32 %v637, %v640
    %vm642 = vweird.f32 %v636
    %vm643 = vweird.f32 %v637
    %vm644 = vmor %vm642, %vm643
    %v645 = vsel %vm644, %v637, %v641
    %v646 = vand.u32 2147483647, %v636
    %vm647 = vcmp.eq.f32.partialorder %v646, 8.507059e+37
    %v648 = vand.u32 %v636, 2147483648
    %v649 = vor.u32 1.1754944e-38, %v648
    %v650 = vsel %vm647, %v649, %v645
    %v651 = vmul.f32 1.0, %v650
    %652 = vmatpush.msra.mxu0 %v116
    %653 = vmatpush.msra.mxu0 %v115
    %654 = vmatpush.msra.mxu0 %v114
    %655 = vmatpush.msra.mxu0 %v113
    %656 = vmatpush.msra.mxu0 %v112
    %657 = vmatpush.msra.mxu0 %v111
    %658 = vmatpush.msra.mxu0 %v110
    %659 = vmatpush.msra.mxu0 %v109
    %660 = vmatpush.msra.mxu0 %v108
    %661 = vmatpush.msra.mxu0 %v107
    %662 = vmatpush.msra.mxu0 %v106
    %663 = vmatpush.msra.mxu0 %v105
    %664 = vmatpush.msra.mxu0 %v104
    %665 = vmatpush.msra.mxu0 %v103
    %666 = vmatpush.msra.mxu0 %v102
    %667 = vmatpush.msra.mxu0 %v101
    %668 = vmatmul.f32.gmra.mxu0 %v565
    %v669 = vpop.f32.mrf.mxu0
    %v670 = vadd.f32 %v119, %v669
    %671 = vdwg.mxu0
    %v672 = vmul.f32 %v631, %v670
    %v673 = vadd.f32 %v571, %v672
    %v674 = vtanh.pop %v673
    %v675 = vsub.f32 %v565, %v674
    %v676 = vmul.f32 %v651, %v675
    %v677 = vadd.f32 %v674, %v676
    %s678 = scalar_lea.vmem [#allocation9], 32
    %679 = vst [vmem:[%s678] sm:$0xff] %v677
    %s680 = scalar_lea.vmem [#allocation3], 120
    %v681 = vld [vmem:[%s680] sm:$0xff]
    %v682 = vld [vmem:[%s680 + $0x8] sm:$0xff]
    %v683 = vld [vmem:[%s680 + $0x10] sm:$0xff]
    %684 = vmatpush.msra.mxu0 %v99
    %685 = vmatpush.msra.mxu0 %v97
    %686 = vmatpush.msra.mxu0 %v95
    %687 = vmatpush.msra.mxu0 %v93
    %688 = vmatpush.msra.mxu0 %v91
    %689 = vmatpush.msra.mxu0 %v89
    %690 = vmatpush.msra.mxu0 %v87
    %691 = vmatpush.msra.mxu0 %v85
    %692 = vmatpush.msra.mxu0 %v83
    %693 = vmatpush.msra.mxu0 %v81
    %694 = vmatpush.msra.mxu0 %v79
    %695 = vmatpush.msra.mxu0 %v77
    %696 = vmatpush.msra.mxu0 %v75
    %697 = vmatpush.msra.mxu0 %v73
    %698 = vmatpush.msra.mxu0 %v71
    %699 = vmatpush.msra.mxu0 %v69
    %700 = vmatmul.f32.gmra.mxu0 %v677
    %v701 = vpop.f32.mrf.mxu0
    %v702 = vadd.f32 0.0, %v701
    %703 = vdwg.mxu0
    %704 = vmatpush.msra.mxu0 %v100
    %705 = vmatpush.msra.mxu0 %v98
    %706 = vmatpush.msra.mxu0 %v96
    %707 = vmatpush.msra.mxu0 %v94
    %708 = vmatpush.msra.mxu0 %v92
    %709 = vmatpush.msra.mxu0 %v90
    %710 = vmatpush.msra.mxu0 %v88
    %711 = vmatpush.msra.mxu0 %v86
    %712 = vmatpush.msra.mxu0 %v84
    %713 = vmatpush.msra.mxu0 %v82
    %714 = vmatpush.msra.mxu0 %v80
    %715 = vmatpush.msra.mxu0 %v78
    %716 = vmatpush.msra.mxu0 %v76
    %717 = vmatpush.msra.mxu0 %v74
    %718 = vmatpush.msra.mxu0 %v72
    %719 = vmatpush.msra.mxu0 %v70
    %720 = vmatmul.f32.gmra.mxu0 %v677
    %v721 = vpop.f32.mrf.mxu0
    %v722 = vadd.f32 0.0, %v721
    %723 = vdwg.mxu0
    %v724 = vadd.f32 %v681, %v702
    %v725 = vxor.u32 %v724, 2147483648
    %v726 = vmul.f32 %v725, 1.442695
    %v727 = vpow.pop %v726
    %v728 = vadd.f32 %v727, 1.0
    %v729 = vrcp.pop %v728
    %v730 = vmul.f32 %v728, %v729
    %v731 = vsub.f32 1.0, %v730
    %v732 = vmul.f32 %v729, %v731
    %v733 = vadd.f32 %v729, %v732
    %vm734 = vweird.f32 %v728
    %vm735 = vweird.f32 %v729
    %vm736 = vmor %vm734, %vm735
    %v737 = vsel %vm736, %v729, %v733
    %v738 = vand.u32 2147483647, %v728
    %vm739 = vcmp.eq.f32.partialorder %v738, 8.507059e+37
    %v740 = vand.u32 %v728, 2147483648
    %v741 = vor.u32 1.1754944e-38, %v740
    %v742 = vsel %vm739, %v741, %v737
    %v743 = vmul.f32 1.0, %v742
    %v744 = vadd.f32 %v682, %v722
    %v745 = vxor.u32 %v744, 2147483648
    %v746 = vmul.f32 %v745, 1.442695
    %v747 = vpow.pop %v746
    %v748 = vadd.f32 %v747, 1.0
    %v749 = vrcp.pop %v748
    %v750 = vmul.f32 %v748, %v749
    %v751 = vsub.f32 1.0, %v750
    %v752 = vmul.f32 %v749, %v751
    %v753 = vadd.f32 %v749, %v752
    %vm754 = vweird.f32 %v748
    %vm755 = vweird.f32 %v749
    %vm756 = vmor %vm754, %vm755
    %v757 = vsel %vm756, %v749, %v753
    %v758 = vand.u32 2147483647, %v748
    %vm759 = vcmp.eq.f32.partialorder %v758, 8.507059e+37
    %v760 = vand.u32 %v748, 2147483648
    %v761 = vor.u32 1.1754944e-38, %v760
    %v762 = vsel %vm759, %v761, %v757
    %v763 = vmul.f32 1.0, %v762
    %764 = vmatpush.msra.mxu0 %v116
    %765 = vmatpush.msra.mxu0 %v115
    %766 = vmatpush.msra.mxu0 %v114
    %767 = vmatpush.msra.mxu0 %v113
    %768 = vmatpush.msra.mxu0 %v112
    %769 = vmatpush.msra.mxu0 %v111
    %770 = vmatpush.msra.mxu0 %v110
    %771 = vmatpush.msra.mxu0 %v109
    %772 = vmatpush.msra.mxu0 %v108
    %773 = vmatpush.msra.mxu0 %v107
    %774 = vmatpush.msra.mxu0 %v106
    %775 = vmatpush.msra.mxu0 %v105
    %776 = vmatpush.msra.mxu0 %v104
    %777 = vmatpush.msra.mxu0 %v103
    %778 = vmatpush.msra.mxu0 %v102
    %779 = vmatpush.msra.mxu0 %v101
    %780 = vmatmul.f32.gmra.mxu0 %v677
    %v781 = vpop.f32.mrf.mxu0
    %v782 = vadd.f32 %v119, %v781
    %783 = vdwg.mxu0
    %v784 = vmul.f32 %v743, %v782
    %v785 = vadd.f32 %v683, %v784
    %v786 = vtanh.pop %v785
    %v787 = vsub.f32 %v677, %v786
    %v788 = vmul.f32 %v763, %v787
    %v789 = vadd.f32 %v786, %v788
    %s790 = scalar_lea.vmem [#allocation9], 40
    %791 = vst [vmem:[%s790] sm:$0xff] %v789
    %s792 = scalar_lea.vmem [#allocation3], 144
    %v793 = vld [vmem:[%s792] sm:$0xff]
    %v794 = vld [vmem:[%s792 + $0x8] sm:$0xff]
    %v795 = vld [vmem:[%s792 + $0x10] sm:$0xff]
    %796 = vmatpush.msra.mxu0 %v99
    %797 = vmatpush.msra.mxu0 %v97
    %798 = vmatpush.msra.mxu0 %v95
    %799 = vmatpush.msra.mxu0 %v93
    %800 = vmatpush.msra.mxu0 %v91
    %801 = vmatpush.msra.mxu0 %v89
    %802 = vmatpush.msra.mxu0 %v87
    %803 = vmatpush.msra.mxu0 %v85
    %804 = vmatpush.msra.mxu0 %v83
    %805 = vmatpush.msra.mxu0 %v81
    %806 = vmatpush.msra.mxu0 %v79
    %807 = vmatpush.msra.mxu0 %v77
    %808 = vmatpush.msra.mxu0 %v75
    %809 = vmatpush.msra.mxu0 %v73
    %810 = vmatpush.msra.mxu0 %v71
    %811 = vmatpush.msra.mxu0 %v69
    %812 = vmatmul.f32.gmra.mxu0 %v789
    %v813 = vpop.f32.mrf.mxu0
    %v814 = vadd.f32 0.0, %v813
    %815 = vdwg.mxu0
    %816 = vmatpush.msra.mxu0 %v100
    %817 = vmatpush.msra.mxu0 %v98
    %818 = vmatpush.msra.mxu0 %v96
    %819 = vmatpush.msra.mxu0 %v94
    %820 = vmatpush.msra.mxu0 %v92
    %821 = vmatpush.msra.mxu0 %v90
    %822 = vmatpush.msra.mxu0 %v88
    %823 = vmatpush.msra.mxu0 %v86
    %824 = vmatpush.msra.mxu0 %v84
    %825 = vmatpush.msra.mxu0 %v82
    %826 = vmatpush.msra.mxu0 %v80
    %827 = vmatpush.msra.mxu0 %v78
    %828 = vmatpush.msra.mxu0 %v76
    %829 = vmatpush.msra.mxu0 %v74
    %830 = vmatpush.msra.mxu0 %v72
    %831 = vmatpush.msra.mxu0 %v70
    %832 = vmatmul.f32.gmra.mxu0 %v789
    %v833 = vpop.f32.mrf.mxu0
    %v834 = vadd.f32 0.0, %v833
    %835 = vdwg.mxu0
    %v836 = vadd.f32 %v793, %v814
    %v837 = vxor.u32 %v836, 2147483648
    %v838 = vmul.f32 %v837, 1.442695
    %v839 = vpow.pop %v838
    %v840 = vadd.f32 %v839, 1.0
    %v841 = vrcp.pop %v840
    %v842 = vmul.f32 %v840, %v841
    %v843 = vsub.f32 1.0, %v842
    %v844 = vmul.f32 %v841, %v843
    %v845 = vadd.f32 %v841, %v844
    %vm846 = vweird.f32 %v840
    %vm847 = vweird.f32 %v841
    %vm848 = vmor %vm846, %vm847
    %v849 = vsel %vm848, %v841, %v845
    %v850 = vand.u32 2147483647, %v840
    %vm851 = vcmp.eq.f32.partialorder %v850, 8.507059e+37
    %v852 = vand.u32 %v840, 2147483648
    %v853 = vor.u32 1.1754944e-38, %v852
    %v854 = vsel %vm851, %v853, %v849
    %v855 = vmul.f32 1.0, %v854
    %v856 = vadd.f32 %v794, %v834
    %v857 = vxor.u32 %v856, 2147483648
    %v858 = vmul.f32 %v857, 1.442695
    %v859 = vpow.pop %v858
    %v860 = vadd.f32 %v859, 1.0
    %v861 = vrcp.pop %v860
    %v862 = vmul.f32 %v860, %v861
    %v863 = vsub.f32 1.0, %v862
    %v864 = vmul.f32 %v861, %v863
    %v865 = vadd.f32 %v861, %v864
    %vm866 = vweird.f32 %v860
    %vm867 = vweird.f32 %v861
    %vm868 = vmor %vm866, %vm867
    %v869 = vsel %vm868, %v861, %v865
    %v870 = vand.u32 2147483647, %v860
    %vm871 = vcmp.eq.f32.partialorder %v870, 8.507059e+37
    %v872 = vand.u32 %v860, 2147483648
    %v873 = vor.u32 1.1754944e-38, %v872
    %v874 = vsel %vm871, %v873, %v869
    %v875 = vmul.f32 1.0, %v874
    %876 = vmatpush.msra.mxu0 %v116
    %877 = vmatpush.msra.mxu0 %v115
    %878 = vmatpush.msra.mxu0 %v114
    %879 = vmatpush.msra.mxu0 %v113
    %880 = vmatpush.msra.mxu0 %v112
    %881 = vmatpush.msra.mxu0 %v111
    %882 = vmatpush.msra.mxu0 %v110
    %883 = vmatpush.msra.mxu0 %v109
    %884 = vmatpush.msra.mxu0 %v108
    %885 = vmatpush.msra.mxu0 %v107
    %886 = vmatpush.msra.mxu0 %v106
    %887 = vmatpush.msra.mxu0 %v105
    %888 = vmatpush.msra.mxu0 %v104
    %889 = vmatpush.msra.mxu0 %v103
    %890 = vmatpush.msra.mxu0 %v102
    %891 = vmatpush.msra.mxu0 %v101
    %892 = vmatmul.f32.gmra.mxu0 %v789
    %v893 = vpop.f32.mrf.mxu0
    %v894 = vadd.f32 %v119, %v893
    %895 = vdwg.mxu0
    %v896 = vmul.f32 %v855, %v894
    %v897 = vadd.f32 %v795, %v896
    %v898 = vtanh.pop %v897
    %v899 = vsub.f32 %v789, %v898
    %v900 = vmul.f32 %v875, %v899
    %v901 = vadd.f32 %v898, %v900
    %s902 = scalar_lea.vmem [#allocation9], 48
    %903 = vst [vmem:[%s902] sm:$0xff] %v901
    %s904 = scalar_lea.vmem [#allocation3], 168
    %v905 = vld [vmem:[%s904] sm:$0xff]
    %v906 = vld [vmem:[%s904 + $0x8] sm:$0xff]
    %v907 = vld [vmem:[%s904 + $0x10] sm:$0xff]
    %908 = vmatpush.msra.mxu0 %v99
    %909 = vmatpush.msra.mxu0 %v97
    %910 = vmatpush.msra.mxu0 %v95
    %911 = vmatpush.msra.mxu0 %v93
    %912 = vmatpush.msra.mxu0 %v91
    %913 = vmatpush.msra.mxu0 %v89
    %914 = vmatpush.msra.mxu0 %v87
    %915 = vmatpush.msra.mxu0 %v85
    %916 = vmatpush.msra.mxu0 %v83
    %917 = vmatpush.msra.mxu0 %v81
    %918 = vmatpush.msra.mxu0 %v79
    %919 = vmatpush.msra.mxu0 %v77
    %920 = vmatpush.msra.mxu0 %v75
    %921 = vmatpush.msra.mxu0 %v73
    %922 = vmatpush.msra.mxu0 %v71
    %923 = vmatpush.msra.mxu0 %v69
    %924 = vmatmul.f32.gmra.mxu0 %v901
    %v925 = vpop.f32.mrf.mxu0
    %v926 = vadd.f32 0.0, %v925
    %927 = vdwg.mxu0
    %928 = vmatpush.msra.mxu0 %v100
    %929 = vmatpush.msra.mxu0 %v98
    %930 = vmatpush.msra.mxu0 %v96
    %931 = vmatpush.msra.mxu0 %v94
    %932 = vmatpush.msra.mxu0 %v92
    %933 = vmatpush.msra.mxu0 %v90
    %934 = vmatpush.msra.mxu0 %v88
    %935 = vmatpush.msra.mxu0 %v86
    %936 = vmatpush.msra.mxu0 %v84
    %937 = vmatpush.msra.mxu0 %v82
    %938 = vmatpush.msra.mxu0 %v80
    %939 = vmatpush.msra.mxu0 %v78
    %940 = vmatpush.msra.mxu0 %v76
    %941 = vmatpush.msra.mxu0 %v74
    %942 = vmatpush.msra.mxu0 %v72
    %943 = vmatpush.msra.mxu0 %v70
    %944 = vmatmul.f32.gmra.mxu0 %v901
    %v945 = vpop.f32.mrf.mxu0
    %v946 = vadd.f32 0.0, %v945
    %947 = vdwg.mxu0
    %v948 = vadd.f32 %v905, %v926
    %v949 = vxor.u32 %v948, 2147483648
    %v950 = vmul.f32 %v949, 1.442695
    %v951 = vpow.pop %v950
    %v952 = vadd.f32 %v951, 1.0
    %v953 = vrcp.pop %v952
    %v954 = vmul.f32 %v952, %v953
    %v955 = vsub.f32 1.0, %v954
    %v956 = vmul.f32 %v953, %v955
    %v957 = vadd.f32 %v953, %v956
    %vm958 = vweird.f32 %v952
    %vm959 = vweird.f32 %v953
    %vm960 = vmor %vm958, %vm959
    %v961 = vsel %vm960, %v953, %v957
    %v962 = vand.u32 2147483647, %v952
    %vm963 = vcmp.eq.f32.partialorder %v962, 8.507059e+37
    %v964 = vand.u32 %v952, 2147483648
    %v965 = vor.u32 1.1754944e-38, %v964
    %v966 = vsel %vm963, %v965, %v961
    %v967 = vmul.f32 1.0, %v966
    %v968 = vadd.f32 %v906, %v946
    %v969 = vxor.u32 %v968, 2147483648
    %v970 = vmul.f32 %v969, 1.442695
    %v971 = vpow.pop %v970
    %v972 = vadd.f32 %v971, 1.0
    %v973 = vrcp.pop %v972
    %v974 = vmul.f32 %v972, %v973
    %v975 = vsub.f32 1.0, %v974
    %v976 = vmul.f32 %v973, %v975
    %v977 = vadd.f32 %v973, %v976
    %vm978 = vweird.f32 %v972
    %vm979 = vweird.f32 %v973
    %vm980 = vmor %vm978, %vm979
    %v981 = vsel %vm980, %v973, %v977
    %v982 = vand.u32 2147483647, %v972
    %vm983 = vcmp.eq.f32.partialorder %v982, 8.507059e+37
    %v984 = vand.u32 %v972, 2147483648
    %v985 = vor.u32 1.1754944e-38, %v984
    %v986 = vsel %vm983, %v985, %v981
    %v987 = vmul.f32 1.0, %v986
    %988 = vmatpush.msra.mxu0 %v116
    %989 = vmatpush.msra.mxu0 %v115
    %990 = vmatpush.msra.mxu0 %v114
    %991 = vmatpush.msra.mxu0 %v113
    %992 = vmatpush.msra.mxu0 %v112
    %993 = vmatpush.msra.mxu0 %v111
    %994 = vmatpush.msra.mxu0 %v110
    %995 = vmatpush.msra.mxu0 %v109
    %996 = vmatpush.msra.mxu0 %v108
    %997 = vmatpush.msra.mxu0 %v107
    %998 = vmatpush.msra.mxu0 %v106
    %999 = vmatpush.msra.mxu0 %v105
    %1000 = vmatpush.msra.mxu0 %v104
    %1001 = vmatpush.msra.mxu0 %v103
    %1002 = vmatpush.msra.mxu0 %v102
    %1003 = vmatpush.msra.mxu0 %v101
    %1004 = vmatmul.f32.gmra.mxu0 %v901
    %v1005 = vpop.f32.mrf.mxu0
    %v1006 = vadd.f32 %v119, %v1005
    %1007 = vdwg.mxu0
    %v1008 = vmul.f32 %v967, %v1006
    %v1009 = vadd.f32 %v907, %v1008
    %v1010 = vtanh.pop %v1009
    %v1011 = vsub.f32 %v901, %v1010
    %v1012 = vmul.f32 %v987, %v1011
    %v1013 = vadd.f32 %v1010, %v1012
    %s1014 = scalar_lea.vmem [#allocation9], 56
    %1015 = vst [vmem:[%s1014] sm:$0xff] %v1013
    %1016 = vst [vmem:[#allocation2] sm:$0xff] %v1013
    // Predicated region
    $region34: #{tpu_custom_call.1} parent=1 // pred_check
      _
    $region35: #{tpu_custom_call.1} parent=1 // pred_check_branch
      %1018 = sbr.rel (0) target = $region37
    $region36: #{tpu_custom_call.1} parent=1 // pred_region
      %1020 = vsyncadd [#allocation5], 0
      %s1021 = sshll.u32 [#allocation9], 4
      %s1022 = int_to_ptr.vmem [resolvable:$true] %s1021
      %s1023 = sshll.u32 %s4, 4
      %s1024 = int_to_ptr.hbm [resolvable:$true] %s1023
      %1029 = dma.vmem_to_hbm [thread:$0]  %s1022, 1024, %s1024, [#allocation5], 128, 128, 8
    $region37: #{tpu_custom_call.1} parent=1 // pred_fallthru
      _
    // Predicated region
    $region38: #{tpu_custom_call.1} parent=1 // pred_check
      _
    $region39: #{tpu_custom_call.1} parent=1 // pred_check_branch
      %1031 = sbr.rel (0) target = $region41
    $region40: #{tpu_custom_call.1} parent=1 // pred_region
      %1033 = dma.done [#allocation5], 1024
    $region41: #{tpu_custom_call.1} parent=1 // pred_fallthru
      _
    %1034 = vsyncpa [#allocation4], 1
    %1035 = vsyncpa [#allocation7], 1
    %1036 = vsyncpa [#allocation5], 1

</llo_original>
